<compile_context>
chip_gen: v5e
topology: v5e:2x2
jax: 0.10.0
libtpu: 0.0.40
codegen_flags: <defaults>
</compile_context>

<pallas_src>
import functools

import jax
import jax.numpy as jnp
from jax import lax
from jax.experimental import pallas as pl
from jax.experimental.pallas import tpu as pltpu


_VMEM = pl.BlockSpec(memory_space=pltpu.MemorySpace.VMEM)


def _dot_t(a, b):
    # a @ b.T without materializing b.T: contract axis 1 of both operands.
    return lax.dot_general(a, b, (((1,), (1,)), ((), ())),
                           preferred_element_type=jnp.float32)


# ----------------------------------------------------------------------------
# Kernel 1 (parameter path): build E and F from X, Y — block-wise Gram matmuls.
# ----------------------------------------------------------------------------
def _ef_kernel(eps, x_ref, y_ref, e_ref, f_ref):
    nx = e_ref.shape[0]
    X1 = x_ref[:nx, :]                   # (nx, 2nx)  sublane slice (nx % 8 == 0)
    X2 = x_ref[nx:, :]                   # (nx, 2nx)
    Y = y_ref[...]

    G11 = _dot_t(X1, X1)                 # H[:nx, :nx]  (without eps)
    G22 = _dot_t(X2, X2)                 # H[nx:, nx:]  (without eps)
    f_ref[...] = _dot_t(X2, X1)          # F = H[nx:, :nx] (off-diag: no eps term)

    E = 0.5 * (G11 + G22 + Y - Y.T)
    # 0.5 * (eps*I + eps*I) = eps*I added directly to E's diagonal.
    row = lax.broadcasted_iota(jnp.int32, (nx, nx), 0)
    col = lax.broadcasted_iota(jnp.int32, (nx, nx), 1)
    e_ref[...] = E + jnp.where(row == col, jnp.float32(eps), jnp.float32(0.0))


def compute_E_F(X, Y, eps=1e-4):
    nx = Y.shape[0]
    return pl.pallas_call(
        functools.partial(_ef_kernel, eps),
        out_shape=(
            jax.ShapeDtypeStruct((nx, nx), jnp.float32),
            jax.ShapeDtypeStruct((nx, nx), jnp.float32),
        ),
        in_specs=[_VMEM, _VMEM],
        out_specs=(_VMEM, _VMEM),
    )(X, Y)


# ----------------------------------------------------------------------------
# Kernel 2 (step hot path): single fused MXU matmul  [dx | y] = [x | u] @ W.T.
# ----------------------------------------------------------------------------
def _step_kernel(xu_ref, w_ref, out_ref):
    out_ref[...] = _dot_t(xu_ref[...], w_ref[...])


def fused_step(xu, W_pad):
    B = xu.shape[0]
    D = W_pad.shape[0]
    return pl.pallas_call(
        _step_kernel,
        out_shape=jax.ShapeDtypeStruct((B, D), jnp.float32),
        in_specs=[_VMEM, _VMEM],
        out_specs=_VMEM,
    )(xu, W_pad)


# ----------------------------------------------------------------------------
# Parameter-only precompute: E/F kernel + solve, fused into one step matrix W.
# ----------------------------------------------------------------------------
def precompute_step_matrix(X, Y, B_w, C_w, eps=1e-4):
    nx = Y.shape[0]
    ny, _ = C_w.shape
    nu = B_w.shape[1]

    E, F = compute_E_F(X, Y, eps)
    # TODO(synk): no Pallas TPU linear-solve/inverse primitive; the nx x nx
    # solve E Z = [F | B_w] stays in XLA (more stable than forming E^{-1}).
    Z = jnp.linalg.solve(E, jnp.concatenate([F, B_w], axis=1))     # (nx, nx+nu)

    C_pad = jnp.concatenate(
        [C_w, jnp.zeros((ny, nu), jnp.float32)], axis=1)           # (ny, nx+nu)
    W = jnp.concatenate([Z, C_pad], axis=0)                        # (nx+ny, nx+nu)

    # Row-pad W to a 128 multiple so the fused-step output is lane-dense.
    d_out = pl.cdiv(nx + ny, 128) * 128
    W_pad = jnp.zeros((d_out, nx + nu), jnp.float32).at[: nx + ny].set(W)
    return W_pad


def ssm_step(x, u, W_pad, nx, ny):
    xu = jnp.concatenate([x, u], axis=1)                           # (B, nx+nu)
    out = fused_step(xu, W_pad)                                    # (B, 128)
    return out[:, :nx], out[:, nx:nx + ny]


@jax.jit
def param_implicit_forward(u, x, X, Y, B_w, C_w):
    nx = Y.shape[0]
    ny = C_w.shape[0]
    W_pad = precompute_step_matrix(X, Y, B_w, C_w, eps=1e-4)
    return ssm_step(x, u, W_pad, nx, ny)


# ----------------------------------------------------------------------------
# Pure-JAX reference, mirroring the PyTorch code literally.
# ----------------------------------------------------------------------------
def _reference(u, x, X, Y, B_w, C_w, eps=1e-4):
    nx = Y.shape[0]
    H = X @ X.T + eps * jnp.eye(2 * nx, dtype=jnp.float32)
    H11 = H[:nx, :nx]
    P = H[nx:, nx:]
    F = H[nx:, :nx]
    E = 0.5 * (H11 + P + Y - Y.T)
    Einv = jnp.linalg.inv(E)
    dx = x @ (Einv @ F).T + u @ (Einv @ B_w).T
    y = x @ C_w.T
    return dx, y


if __name__ == "__main__":
    # Small, deterministic setup consistent with the module's __init__.
    nu, nx, ny = 8, 32, 8       # input_dim, state dim, output_dim
    batch = 8

    key = jax.random.PRNGKey(0)
    kX, kY, kB, kC, ku, kx = jax.random.split(key, 6)

    # Parameters (same shapes as the PyTorch module):
    X = jax.random.normal(kX, (2 * nx, 2 * nx), dtype=jnp.float32)   # self.X
    Y = jax.random.normal(kY, (nx, nx), dtype=jnp.float32)           # self.Y
    # nn.Linear(nu, nx).weight -> (nx, nu); nn.Linear(nx, ny).weight -> (ny, nx)
    B_w = jax.random.normal(kB, (nx, nu), dtype=jnp.float32) * 0.1
    C_w = jax.random.normal(kC, (ny, nx), dtype=jnp.float32) * 0.1

    # Inputs.
    u = jax.random.normal(ku, (batch, nu), dtype=jnp.float32)
    x = jax.random.normal(kx, (batch, nx), dtype=jnp.float32)

    dx, y = param_implicit_forward(u, x, X, Y, B_w, C_w)
    jax.block_until_ready((dx, y))

    dx_ref, y_ref = _reference(u, x, X, Y, B_w, C_w)
    assert dx.shape == (batch, nx) and y.shape == (batch, ny)
    assert jnp.allclose(dx, dx_ref, rtol=1e-3, atol=1e-3), "dx mismatch"
    assert jnp.allclose(y, y_ref, rtol=1e-3, atol=1e-3), "y mismatch"

    print("KERNEL_OK")
</pallas_src>

<mosaic_0001>
module attributes {stable_mosaic.version = 11 : i64} {
  func.func @_ef_kernel(%arg0: memref<64x64xf32, #tpu.memory_space<vmem>>, %arg1: memref<32x32xf32, #tpu.memory_space<vmem>>, %arg2: memref<32x32xf32, #tpu.memory_space<vmem>>, %arg3: memref<32x32xf32, #tpu.memory_space<vmem>>) attributes {dimension_semantics = [], scalar_prefetch = 0 : i64, scratch_operands = 0 : i64, tpu.core_type = #tpu.core_type<tc>} {
    %c0 = arith.constant 0 : index
    %c0_0 = arith.constant 0 : index
    %0 = vector.load %arg0[%c0, %c0_0] : memref<64x64xf32, #tpu.memory_space<vmem>>, vector<32x64xf32>
    %c32 = arith.constant 32 : index
    %c0_1 = arith.constant 0 : index
    %1 = vector.load %arg0[%c32, %c0_1] : memref<64x64xf32, #tpu.memory_space<vmem>>, vector<32x64xf32>
    %c0_2 = arith.constant 0 : index
    %c0_3 = arith.constant 0 : index
    %2 = vector.load %arg1[%c0_2, %c0_3] : memref<32x32xf32, #tpu.memory_space<vmem>>, vector<32x32xf32>
    %cst = arith.constant dense<0.000000e+00> : vector<32x32xf32>
    %3 = tpu.matmul %0, %0, %cst {dimension_numbers = #tpu.dot_dimension_numbers<[1], [1], [0], [0], [0, 0, 1, 0], [], []>} : vector<32x64xf32>, vector<32x64xf32>, vector<32x32xf32> -> vector<32x32xf32>
    %cst_4 = arith.constant dense<0.000000e+00> : vector<32x32xf32>
    %4 = tpu.matmul %1, %1, %cst_4 {dimension_numbers = #tpu.dot_dimension_numbers<[1], [1], [0], [0], [0, 0, 1, 0], [], []>} : vector<32x64xf32>, vector<32x64xf32>, vector<32x32xf32> -> vector<32x32xf32>
    %cst_5 = arith.constant dense<0.000000e+00> : vector<32x32xf32>
    %5 = tpu.matmul %1, %0, %cst_5 {dimension_numbers = #tpu.dot_dimension_numbers<[1], [1], [0], [0], [0, 0, 1, 0], [], []>} : vector<32x64xf32>, vector<32x64xf32>, vector<32x32xf32> -> vector<32x32xf32>
    %c0_6 = arith.constant 0 : index
    %c0_7 = arith.constant 0 : index
    %6 = vector.load %arg3[%c0_6, %c0_7] : memref<32x32xf32, #tpu.memory_space<vmem>>, vector<32x32xf32>
    tpu.vector_store %arg3[%c0_6, %c0_7], %5 {strides = array<i32>} : memref<32x32xf32, #tpu.memory_space<vmem>>, vector<32x32xf32>,
    %7 = arith.addf %3, %4 : vector<32x32xf32>
    %8 = arith.addf %7, %2 : vector<32x32xf32>
    %9 = tpu.transpose %2, [1, 0] : vector<32x32xf32> -> vector<32x32xf32>
    %10 = arith.subf %8, %9 : vector<32x32xf32>
    %cst_8 = arith.constant 5.000000e-01 : f32
    %11 = vector.broadcast %cst_8 : f32 to vector<32x32xf32>
    %12 = arith.mulf %11, %10 : vector<32x32xf32>
    %13 = tpu.iota {dimensions = array<i32: 0>} : vector<32x32xi32>
    %14 = tpu.iota {dimensions = array<i32: 1>} : vector<32x32xi32>
    %15 = arith.cmpi eq, %13, %14 : vector<32x32xi32>
    %cst_9 = arith.constant 9.99999974E-5 : f32
    %cst_10 = arith.constant 0.000000e+00 : f32
    %16 = vector.broadcast %cst_9 : f32 to vector<32x32xf32>
    %17 = vector.broadcast %cst_10 : f32 to vector<32x32xf32>
    %18 = arith.select %15, %16, %17 : vector<32x32xi1>, vector<32x32xf32>
    %19 = arith.addf %12, %18 : vector<32x32xf32>
    %c0_11 = arith.constant 0 : index
    %c0_12 = arith.constant 0 : index
    %20 = vector.load %arg2[%c0_11, %c0_12] : memref<32x32xf32, #tpu.memory_space<vmem>>, vector<32x32xf32>
    tpu.vector_store %arg2[%c0_11, %c0_12], %19 {strides = array<i32>} : memref<32x32xf32, #tpu.memory_space<vmem>>, vector<32x32xf32>,
    return
  }
}

module attributes {stable_mosaic.version = 11 : i64} {
  func.func @_step_kernel(%arg0: memref<8x40xf32, #tpu.memory_space<vmem>>, %arg1: memref<128x40xf32, #tpu.memory_space<vmem>>, %arg2: memref<8x128xf32, #tpu.memory_space<vmem>>) attributes {dimension_semantics = [], scalar_prefetch = 0 : i64, scratch_operands = 0 : i64, tpu.core_type = #tpu.core_type<tc>} {
    %c0 = arith.constant 0 : index
    %c0_0 = arith.constant 0 : index
    %0 = vector.load %arg0[%c0, %c0_0] : memref<8x40xf32, #tpu.memory_space<vmem>>, vector<8x40xf32>
    %c0_1 = arith.constant 0 : index
    %c0_2 = arith.constant 0 : index
    %1 = vector.load %arg1[%c0_1, %c0_2] : memref<128x40xf32, #tpu.memory_space<vmem>>, vector<128x40xf32>
    %cst = arith.constant dense<0.000000e+00> : vector<8x128xf32>
    %2 = tpu.matmul %0, %1, %cst {dimension_numbers = #tpu.dot_dimension_numbers<[1], [1], [0], [0], [0, 0, 1, 0], [], []>} : vector<8x40xf32>, vector<128x40xf32>, vector<8x128xf32> -> vector<8x128xf32>
    %c0_3 = arith.constant 0 : index
    %c0_4 = arith.constant 0 : index
    %3 = vector.load %arg2[%c0_3, %c0_4] : memref<8x128xf32, #tpu.memory_space<vmem>>, vector<8x128xf32>
    tpu.vector_store %arg2[%c0_3, %c0_4], %2 {strides = array<i32>} : memref<8x128xf32, #tpu.memory_space<vmem>>, vector<8x128xf32>,
    return
  }
}

</mosaic_0001>

<llo_original>
// kernel: custom-call.8
$region0: #{custom-call.8}
  %s0 = inlined_call_operand.vmem [shape: f32[32,32], index: 0, kind: input, shape index: {}]
  %s1 = inlined_call_operand.vmem [shape: f32[32,32], index: 1, kind: output, shape index: {0}]
  %s2 = inlined_call_operand.hbm [shape: s32[32], index: 2, kind: output, shape index: {1}]
  %s3 = inlined_call_operand.vmem [shape: s32[32], index: 3, kind: output, shape index: {2}]
  %4 = xla_tuple %s1, %s2, %s3
  $region1: #{custom-call.8} parent=0
    #allocation0 [shape = 'u8[16384]{0}', space=vmem, size = 0x4000, scoped, tag = 'operand span for operand 0']
    #allocation1 [shape = 'u8[16384]{0}', space=vmem, size = 0x4000, scoped, tag = 'operand span for operand 1']
    #allocation2 [shape = 'u8[4096]{0}', space=vmem, size = 0x1000, scoped, tag = 'operand span for operand 2']
    #allocation3 [shape = 'u8[512]{0}', space=vmem, size = 0x400, scoped, tag = 'packed  for operand 2']
    #allocation4 [shape = 's32[1]{0}', space=sflag, size = 0x4, scoped, tag = 'scoped memory for custom-call.8']
    #allocation5 [shape = 'u8[4096]{0}', space=vmem, size = 0x1000, scoped, tag = 'operand span for operand 3']
    #allocation6 [shape = 'u8[512]{0}', space=vmem, size = 0x400, scoped, tag = 'packed  for operand 3']
    #allocation7 [shape = 's32[32,128]{1,0}', space=vmem, size = 0x4000, scoped, tag = 'scratch for permutations']
    %5 = vsyncpa [#allocation4], 0
    // Predicated region
    $region2: #{custom-call.8} parent=1 // pred_check
      _
    $region3: #{custom-call.8} parent=1 // pred_check_branch
      %7 = sbr.rel (0) target = $region5
    $region4: #{custom-call.8} parent=1 // pred_region
      %p9 = scmp.gt.s32.totalorder 4, 0
      // Predicated region
      $region6: #{custom-call.8} parent=4 // pred_check
        %p10 = pneg %p9
      $region7: #{custom-call.8} parent=4 // pred_check_branch
        %12 = sbr.rel (%p10) target = $region9
      $region8: #{custom-call.8} parent=4 // pred_region
        %s13 = ssub.s32 4, 1
        %s14 = smul.u32 %s13, 8
        %s15 = scalar_lea.vmem %s0, %s14
        %v16 = vld [vmem:[%s0] sm:$0xff]
        // While loop
        $region10: #{custom-call.8} parent=8 // loop_pre_header
          _
        $region11: #{custom-call.8} parent=8 // loop_header
          %s17 = sphi %s0, %s39
          %s18 = sphi [#allocation0], %s40
          %v19 = vphi %v16, %v41
          %s20 = ssub.s32 %s15, 64
          %p21 = scmp.gt.s32.totalorder %s17, %s20
        $region12: #{custom-call.8} parent=8 // loop_header_branch
          %23 = sbr.rel (%p21) target = $region16
        $region13: #{custom-call.8} parent=8 // loop_body
          %24 = vst [vmem:[%s18] sm:$0xff] %v19
          %v25 = vld [vmem:[%s17 + $0x8] sm:$0xff]
          %26 = vst [vmem:[%s18 + $0x8] sm:$0xff] %v25
          %v27 = vld [vmem:[%s17 + $0x10] sm:$0xff]
          %28 = vst [vmem:[%s18 + $0x10] sm:$0xff] %v27
          %v29 = vld [vmem:[%s17 + $0x18] sm:$0xff]
          %30 = vst [vmem:[%s18 + $0x18] sm:$0xff] %v29
          %v31 = vld [vmem:[%s17 + $0x20] sm:$0xff]
          %32 = vst [vmem:[%s18 + $0x20] sm:$0xff] %v31
          %v33 = vld [vmem:[%s17 + $0x28] sm:$0xff]
          %34 = vst [vmem:[%s18 + $0x28] sm:$0xff] %v33
          %v35 = vld [vmem:[%s17 + $0x30] sm:$0xff]
          %36 = vst [vmem:[%s18 + $0x30] sm:$0xff] %v35
          %v37 = vld [vmem:[%s17 + $0x38] sm:$0xff]
          %38 = vst [vmem:[%s18 + $0x38] sm:$0xff] %v37
        $region14: #{custom-call.8} parent=8 // loop_footer
          %s39 = scalar_lea.vmem %s17, 64
          %s40 = scalar_lea.vmem %s18, 64
          %v41 = vld [vmem:[%s17 + $0x40] sm:$0xff]
        $region15: #{custom-call.8} parent=8 // loop_footer_branch
          %42 = sbr.rel target = $region11
        $region16: #{custom-call.8} parent=8 // loop_exit
          _
        // While loop
        $region17: #{custom-call.8} parent=8 // loop_pre_header
          _
        $region18: #{custom-call.8} parent=8 // loop_header
          %s43 = sphi %s17, %s51
          %s44 = sphi %s18, %s52
          %v45 = vphi %v19, %v45
          %p46 = scmp.gt.s32.totalorder %s43, %s15
        $region19: #{custom-call.8} parent=8 // loop_header_branch
          %48 = sbr.rel (%p46) target = $region23
        $region20: #{custom-call.8} parent=8 // loop_body
          %v49 = vld [vmem:[%s43] sm:$0xff]
          %50 = vst [vmem:[%s44] sm:$0xff] %v49
        $region21: #{custom-call.8} parent=8 // loop_footer
          %s51 = scalar_lea.vmem %s43, 8
          %s52 = scalar_lea.vmem %s44, 8
        $region22: #{custom-call.8} parent=8 // loop_footer_branch
          %53 = sbr.rel target = $region18
        $region23: #{custom-call.8} parent=8 // loop_exit
          _
      $region9: #{custom-call.8} parent=4 // pred_fallthru
        _
      %s55 = ssub.s32 1, 1
      %s56 = smul.u32 4, 8
      %s57 = scalar_lea.vmem [#allocation0], %s56
      %s58 = smul.u32 4, 8
      %s59 = scalar_lea.vmem %s0, %s58
      %v60 = vld [vmem:[%s59] sm:%s55]
      %61 = vst [vmem:[%s57] sm:%s55] %v60
    $region5: #{custom-call.8} parent=1 // pred_fallthru
      _
    %v62 = vld [vmem:[#allocation0] sm:$0xff]
    %63 = vst [vmem:[#allocation1] sm:$0xff] %v62
    %s64 = scalar_lea.vmem [#allocation1], 8
    %s65 = scalar_lea.vmem [#allocation0], 8
    %v66 = vld [vmem:[%s65] sm:$0xff]
    %67 = vst [vmem:[%s64] sm:$0xff] %v66
    %s68 = scalar_lea.vmem [#allocation1], 16
    %s69 = scalar_lea.vmem [#allocation0], 16
    %v70 = vld [vmem:[%s69] sm:$0xff]
    %71 = vst [vmem:[%s68] sm:$0xff] %v70
    %s72 = scalar_lea.vmem [#allocation1], 24
    %s73 = scalar_lea.vmem [#allocation0], 24
    %v74 = vld [vmem:[%s73] sm:$0xff]
    %75 = vst [vmem:[%s72] sm:$0xff] %v74
    %76 = vst [vmem:[#allocation2] sm:$0x1] 0
    %v77 = vlaneseq
    %v78 = vshrl.u32 %v77, 7
    %v79 = vmov %v78
    loop: start=0, step=1, limit=4
    $region24: #{custom-call.8} parent=1 // loop_pre_header
      _
    $region25: #{custom-call.8} parent=1 // loop_header
      %s81 = sphi 0, %s85
      %p82 = scmp.ge.s32.totalorder %s81, 4
    $region26: #{custom-call.8} parent=1 // loop_header_branch
      %84 = sbr.rel (%p82) target = $region30
    $region27: #{custom-call.8} parent=1 // loop_body
      %s86 = smul.addr %s81, 8
      %s87 = scalar_lea.vmem [#allocation7], %s86
      %s88 = smul.u32 %s81, 8
      %v89 = vstv %s88
      %v90 = vadd.s32 %v79, %v89
      %91 = vst [vmem:[%s87] sm:$0xff] %v90
    $region28: #{custom-call.8} parent=1 // loop_footer
      %s85 = sadd.s32 1, %s81
    $region29: #{custom-call.8} parent=1 // loop_footer_branch
      %80 = sbr.rel target = $region25
    $region30: #{custom-call.8} parent=1 // loop_exit
      _
    loop: start=0, step=1, limit=32
    $region31: #{custom-call.8} parent=1 // loop_pre_header
      _
    $region32: #{custom-call.8} parent=1 // loop_header
      %s93 = sphi 0, %s97
      %p94 = scmp.ge.s32.totalorder %s93, 32
    $region33: #{custom-call.8} parent=1 // loop_header_branch
      %96 = sbr.rel (%p94) target = $region37
    $region34: #{custom-call.8} parent=1 // loop_body
      %v98 = vstv %s93
      %v99 = vlaneseq
      %v100 = vshrl.u32 %v99, 7
      %v101 = vmov %v100
      %v102 = vld [vmem:[#allocation1] sm:$0xff]
      %v103 = vand.u32 2147483647, %v102
      %v105 = vstv %s93
      %vm106 = vcmp.ge.s32.totalorder %v101, %v105
      %vm107 = vcmp.lt.s32.totalorder %v101, 32
      %vm108 = vmand %vm106, %vm107
      %vm109 = vcmp.lt.f32.partialorder -inf, %v103
      %vm110 = vmand %vm108, %vm109
      %v111 = vsel %vm110, %v101, %v98
      %v112 = vsel %vm110, %v103, -inf
      %s113 = scalar_lea.vmem [#allocation1], 8
      %v114 = vld [vmem:[%s113] sm:$0xff]
      %v115 = vand.u32 2147483647, %v114
      %v116 = vadd.s32 %v101, 8
      %v117 = vstv %s93
      %vm118 = vcmp.ge.s32.totalorder %v116, %v117
      %vm119 = vcmp.lt.s32.totalorder %v116, 32
      %vm120 = vmand %vm118, %vm119
      %vm121 = vcmp.lt.f32.partialorder %v112, %v115
      %vm122 = vmand %vm120, %vm121
      %v123 = vsel %vm122, %v116, %v111
      %v124 = vsel %vm122, %v115, %v112
      %s125 = scalar_lea.vmem [#allocation1], 16
      %v126 = vld [vmem:[%s125] sm:$0xff]
      %v127 = vand.u32 2147483647, %v126
      %v128 = vadd.s32 %v101, 16
      %v129 = vstv %s93
      %vm130 = vcmp.ge.s32.totalorder %v128, %v129
      %vm131 = vcmp.lt.s32.totalorder %v128, 32
      %vm132 = vmand %vm130, %vm131
      %vm133 = vcmp.lt.f32.partialorder %v124, %v127
      %vm134 = vmand %vm132, %vm133
      %v135 = vsel %vm134, %v128, %v123
      %v136 = vsel %vm134, %v127, %v124
      %s137 = scalar_lea.vmem [#allocation1], 24
      %v138 = vld [vmem:[%s137] sm:$0xff]
      %v139 = vand.u32 2147483647, %v138
      %v140 = vadd.s32 %v101, 24
      %v141 = vstv %s93
      %vm142 = vcmp.ge.s32.totalorder %v140, %v141
      %vm143 = vcmp.lt.s32.totalorder %v140, 32
      %vm144 = vmand %vm142, %vm143
      %vm145 = vcmp.lt.f32.partialorder %v136, %v139
      %vm146 = vmand %vm144, %vm145
      %v147 = vsel %vm146, %v140, %v135
      %v148 = vsel %vm146, %v139, %v136
      %v149 = vrot.slane %v148, 1
      %v150 = vrot.slane %v147, 1
      %vm151 = vcmp.ge.f32.partialorder %v149, %v148
      %v152 = vsel %vm151, %v149, %v148
      %v153 = vsel %vm151, %v150, %v147
      %v154 = vrot.slane %v149, 1
      %v155 = vrot.slane %v150, 1
      %vm156 = vcmp.ge.f32.partialorder %v154, %v152
      %v157 = vsel %vm156, %v154, %v152
      %v158 = vsel %vm156, %v155, %v153
      %v159 = vrot.slane %v154, 1
      %v160 = vrot.slane %v155, 1
      %vm161 = vcmp.ge.f32.partialorder %v159, %v157
      %v162 = vsel %vm161, %v159, %v157
      %v163 = vsel %vm161, %v160, %v158
      %v164 = vrot.slane %v159, 1
      %v165 = vrot.slane %v160, 1
      %vm166 = vcmp.ge.f32.partialorder %v164, %v162
      %v167 = vsel %vm166, %v164, %v162
      %v168 = vsel %vm166, %v165, %v163
      %v169 = vrot.slane %v164, 1
      %v170 = vrot.slane %v165, 1
      %vm171 = vcmp.ge.f32.partialorder %v169, %v167
      %v172 = vsel %vm171, %v169, %v167
      %v173 = vsel %vm171, %v170, %v168
      %v174 = vrot.slane %v169, 1
      %v175 = vrot.slane %v170, 1
      %vm176 = vcmp.ge.f32.partialorder %v174, %v172
      %v177 = vsel %vm176, %v174, %v172
      %v178 = vsel %vm176, %v175, %v173
      %v179 = vrot.slane %v174, 1
      %v180 = vrot.slane %v175, 1
      %vm181 = vcmp.ge.f32.partialorder %v179, %v177
      %v182 = vsel %vm181, %v179, %v177
      %v183 = vsel %vm181, %v180, %v178
      %s184 = ssub.s32 128, %s93
      %185 = vrot.lane.b32.xlu0 %v183, %s184
      %v186 = vpop.permute.xlu0 %185
      %s187 = vtos %v186
      %v188 = vstv %s93
      %v189 = vlaneseq
      %v190 = vand.u32 %v189, 127
      %vm191 = vcmp.eq.s32.totalorder %v190, %v188
      %v192 = vstv %s187
      %v193 = vld [vmem:[#allocation2] ss:$0 sm:$0xff]
      %v194 = vsel %vm191, %v192, %v193
      %195 = vst [vmem:[#allocation2] sm:$0x1] %v194
      %s196 = scalar_lea.vmem [#allocation1], %s93
      %s197 = scalar_lea.vmem [#allocation1], %s187
      %v198 = vld [vmem:[%s196] ss:$0 sm:$0xff]
      %v199 = vld [vmem:[%s197] ss:$0 sm:$0xff]
      %200 = vst [vmem:[%s197] sm:$0x1] %v198
      %201 = vst [vmem:[%s196] sm:$0x1] %v199
      %s202 = scalar_lea.vmem [#allocation7], %s93
      %s203 = scalar_lea.vmem [#allocation7], %s187
      %v204 = vld [vmem:[%s202] ss:$0 sm:$0xff]
      %v205 = vld [vmem:[%s203] ss:$0 sm:$0xff]
      %206 = vst [vmem:[%s203] sm:$0x1] %v204
      %207 = vst [vmem:[%s202] sm:$0x1] %v205
      %vm208 = vcmp.ne.f32.partialorder %v199, 0.0
      %vm209 = vmand %vm191, %vm208
      %v210 = vsel %vm209, %v199, 1.0
      %v211 = vlaneseq
      %v212 = vand.u32 %v211, 127
      %v213 = vstv %s93
      %vm214 = vcmp.gt.s32.totalorder %v212, %v213
      %v215 = vsel %vm214, %v199, 0.0
      %v216 = vlaneseq
      %v217 = vshrl.u32 %v216, 7
      %v218 = vmov %v217
      %v219 = vld [vmem:[#allocation1] sm:$0xff]
      %v221 = vstv %s93
      %vm222 = vcmp.gt.s32.totalorder %v218, %v221
      %v223 = vsel %vm222, %v210, 1.0
      %v224 = vrcp.pop %v223
      %v225 = vmul.f32 %v223, %v224
      %v226 = vsub.f32 1.0, %v225
      %v227 = vmul.f32 %v224, %v226
      %v228 = vadd.f32 %v224, %v227
      %vm229 = vweird.f32 %v223
      %vm230 = vweird.f32 %v224
      %vm231 = vmor %vm229, %vm230
      %v232 = vsel %vm231, %v224, %v228
      %v233 = vand.u32 2147483647, %v223
      %vm234 = vcmp.eq.f32.partialorder %v233, 8.507059e+37
      %v235 = vand.u32 %v223, 2147483648
      %v236 = vor.u32 1.1754944e-38, %v235
      %v237 = vsel %vm234, %v236, %v232
      %v238 = vmul.f32 %v219, %v237
      %vm239 = vmand %vm222, %vm191
      %v240 = vsel %vm239, %v238, 0.0
      %241 = vadd.xlane.f32.xlu0 %v240
      %v242 = vpop.xlane.xlu0 %241
      %v243 = vmul.f32 %v242, %v215
      %v244 = vsub.f32 %v238, %v243
      %245 = vst [vmem:[#allocation1] sm:$0xff] %v244
      %s246 = scalar_lea.vmem [#allocation1], 8
      %v247 = vld [vmem:[%s246] sm:$0xff]
      %v248 = vadd.s32 %v218, 8
      %v249 = vstv %s93
      %vm250 = vcmp.gt.s32.totalorder %v248, %v249
      %v251 = vsel %vm250, %v210, 1.0
      %v252 = vrcp.pop %v251
      %v253 = vmul.f32 %v251, %v252
      %v254 = vsub.f32 1.0, %v253
      %v255 = vmul.f32 %v252, %v254
      %v256 = vadd.f32 %v252, %v255
      %vm257 = vweird.f32 %v251
      %vm258 = vweird.f32 %v252
      %vm259 = vmor %vm257, %vm258
      %v260 = vsel %vm259, %v252, %v256
      %v261 = vand.u32 2147483647, %v251
      %vm262 = vcmp.eq.f32.partialorder %v261, 8.507059e+37
      %v263 = vand.u32 %v251, 2147483648
      %v264 = vor.u32 1.1754944e-38, %v263
      %v265 = vsel %vm262, %v264, %v260
      %v266 = vmul.f32 %v247, %v265
      %vm267 = vmand %vm250, %vm191
      %v268 = vsel %vm267, %v266, 0.0
      %269 = vadd.xlane.f32.xlu0 %v268
      %v270 = vpop.xlane.xlu0 %269
      %v271 = vmul.f32 %v270, %v215
      %v272 = vsub.f32 %v266, %v271
      %273 = vst [vmem:[%s246] sm:$0xff] %v272
      %s274 = scalar_lea.vmem [#allocation1], 16
      %v275 = vld [vmem:[%s274] sm:$0xff]
      %v276 = vadd.s32 %v218, 16
      %v277 = vstv %s93
      %vm278 = vcmp.gt.s32.totalorder %v276, %v277
      %v279 = vsel %vm278, %v210, 1.0
      %v280 = vrcp.pop %v279
      %v281 = vmul.f32 %v279, %v280
      %v282 = vsub.f32 1.0, %v281
      %v283 = vmul.f32 %v280, %v282
      %v284 = vadd.f32 %v280, %v283
      %vm285 = vweird.f32 %v279
      %vm286 = vweird.f32 %v280
      %vm287 = vmor %vm285, %vm286
      %v288 = vsel %vm287, %v280, %v284
      %v289 = vand.u32 2147483647, %v279
      %vm290 = vcmp.eq.f32.partialorder %v289, 8.507059e+37
      %v291 = vand.u32 %v279, 2147483648
      %v292 = vor.u32 1.1754944e-38, %v291
      %v293 = vsel %vm290, %v292, %v288
      %v294 = vmul.f32 %v275, %v293
      %vm295 = vmand %vm278, %vm191
      %v296 = vsel %vm295, %v294, 0.0
      %297 = vadd.xlane.f32.xlu0 %v296
      %v298 = vpop.xlane.xlu0 %297
      %v299 = vmul.f32 %v298, %v215
      %v300 = vsub.f32 %v294, %v299
      %301 = vst [vmem:[%s274] sm:$0xff] %v300
      %s302 = scalar_lea.vmem [#allocation1], 24
      %v303 = vld [vmem:[%s302] sm:$0xff]
      %v304 = vadd.s32 %v218, 24
      %v305 = vstv %s93
      %vm306 = vcmp.gt.s32.totalorder %v304, %v305
      %v307 = vsel %vm306, %v210, 1.0
      %v308 = vrcp.pop %v307
      %v309 = vmul.f32 %v307, %v308
      %v310 = vsub.f32 1.0, %v309
      %v311 = vmul.f32 %v308, %v310
      %v312 = vadd.f32 %v308, %v311
      %vm313 = vweird.f32 %v307
      %vm314 = vweird.f32 %v308
      %vm315 = vmor %vm313, %vm314
      %v316 = vsel %vm315, %v308, %v312
      %v317 = vand.u32 2147483647, %v307
      %vm318 = vcmp.eq.f32.partialorder %v317, 8.507059e+37
      %v319 = vand.u32 %v307, 2147483648
      %v320 = vor.u32 1.1754944e-38, %v319
      %v321 = vsel %vm318, %v320, %v316
      %v322 = vmul.f32 %v303, %v321
      %vm323 = vmand %vm306, %vm191
      %v324 = vsel %vm323, %v322, 0.0
      %325 = vadd.xlane.f32.xlu0 %v324
      %v326 = vpop.xlane.xlu0 %325
      %v327 = vmul.f32 %v326, %v215
      %v328 = vsub.f32 %v322, %v327
      %329 = vst [vmem:[%s302] sm:$0xff] %v328
    $region35: #{custom-call.8} parent=1 // loop_footer
      %s97 = sadd.s32 1, %s93
    $region36: #{custom-call.8} parent=1 // loop_footer_branch
      %92 = sbr.rel target = $region32
    $region37: #{custom-call.8} parent=1 // loop_exit
      _
    %v330 = vld [vmem:[#allocation7] sm:$0xff]
    %s331 = scalar_lea.vmem [#allocation7], 8
    %v332 = vld [vmem:[%s331] sm:$0xff]
    %s333 = scalar_lea.vmem [#allocation7], 16
    %v334 = vld [vmem:[%s333] sm:$0xff]
    %s335 = scalar_lea.vmem [#allocation7], 24
    %v336 = vld [vmem:[%s335] sm:$0xff]
    %s337 = scalar_lea.vmem [#allocation7], 32
    %s338 = scalar_lea.vmem [#allocation7], 40
    %s339 = scalar_lea.vmem [#allocation7], 48
    %s340 = scalar_lea.vmem [#allocation7], 56
    %s341 = scalar_lea.vmem [#allocation7], 64
    %s342 = scalar_lea.vmem [#allocation7], 72
    %s343 = scalar_lea.vmem [#allocation7], 80
    %s344 = scalar_lea.vmem [#allocation7], 88
    %s345 = scalar_lea.vmem [#allocation7], 96
    %s346 = scalar_lea.vmem [#allocation7], 104
    %s347 = scalar_lea.vmem [#allocation7], 112
    %s348 = scalar_lea.vmem [#allocation7], 120
    %349 = vxpose.xlu0.b32.start [1/16] %v330, 128
    %350 = vxpose.xlu0.b32.cont [2/16] %v332, 128
    %351 = vxpose.xlu0.b32.cont [3/16] %v334, 128
    %352 = vxpose.xlu0.b32.cont [4/16] %v336, 128
    %353 = vxpose.xlu0.b32.cont [5/16] 0, 128
    %354 = vxpose.xlu0.b32.cont [6/16] 0, 128
    %355 = vxpose.xlu0.b32.cont [7/16] 0, 128
    %356 = vxpose.xlu0.b32.cont [8/16] 0, 128
    %357 = vxpose.xlu0.b32.cont [9/16] 0, 128
    %358 = vxpose.xlu0.b32.cont [10/16] 0, 128
    %359 = vxpose.xlu0.b32.cont [11/16] 0, 128
    %360 = vxpose.xlu0.b32.cont [12/16] 0, 128
    %361 = vxpose.xlu0.b32.cont [13/16] 0, 128
    %362 = vxpose.xlu0.b32.cont [14/16] 0, 128
    %363 = vxpose.xlu0.b32.cont [15/16] 0, 128
    %364 = vxpose.xlu0.b32.end [16/16] 0, 128
    %v365 = vpop.trf.xlu0
    %v366 = vpop.trf.xlu0
    %v367 = vpop.trf.xlu0
    %v368 = vpop.trf.xlu0
    %v369 = vpop.trf.xlu0
    %v370 = vpop.trf.xlu0
    %v371 = vpop.trf.xlu0
    %v372 = vpop.trf.xlu0
    %v373 = vpop.trf.xlu0
    %v374 = vpop.trf.xlu0
    %v375 = vpop.trf.xlu0
    %v376 = vpop.trf.xlu0
    %v377 = vpop.trf.xlu0
    %v378 = vpop.trf.xlu0
    %v379 = vpop.trf.xlu0
    %v380 = vpop.trf.xlu0
    %381 = vst [vmem:[#allocation5] sm:$0x1] %v365
    %s383 = ssub.s32 2, 1
    %v384 = vld [vmem:[#allocation2] sm:%s383]
    %s386 = ssub.s32 2, 1
    %387 = vst [vmem:[#allocation3] sm:%s386] %v384
    %s389 = ssub.s32 2, 1
    %v390 = vld [vmem:[#allocation5] sm:%s389]
    %s392 = ssub.s32 2, 1
    %393 = vst [vmem:[#allocation6] sm:%s392] %v390
    // Predicated region
    $region38: #{custom-call.8} parent=1 // pred_check
      _
    $region39: #{custom-call.8} parent=1 // pred_check_branch
      %395 = sbr.rel (0) target = $region41
    $region40: #{custom-call.8} parent=1 // pred_region
      %p397 = scmp.gt.s32.totalorder 4, 0
      // Predicated region
      $region42: #{custom-call.8} parent=40 // pred_check
        %p398 = pneg %p397
      $region43: #{custom-call.8} parent=40 // pred_check_branch
        %400 = sbr.rel (%p398) target = $region45
      $region44: #{custom-call.8} parent=40 // pred_region
        %s401 = ssub.s32 4, 1
        %s402 = smul.u32 %s401, 8
        %s403 = scalar_lea.vmem [#allocation1], %s402
        %v404 = vld [vmem:[#allocation1] sm:$0xff]
        // While loop
        $region46: #{custom-call.8} parent=44 // loop_pre_header
          _
        $region47: #{custom-call.8} parent=44 // loop_header
          %s405 = sphi [#allocation1], %s427
          %s406 = sphi %s1, %s428
          %v407 = vphi %v404, %v429
          %s408 = ssub.s32 %s403, 64
          %p409 = scmp.gt.s32.totalorder %s405, %s408
        $region48: #{custom-call.8} parent=44 // loop_header_branch
          %411 = sbr.rel (%p409) target = $region52
        $region49: #{custom-call.8} parent=44 // loop_body
          %412 = vst [vmem:[%s406] sm:$0xff] %v407
          %v413 = vld [vmem:[%s405 + $0x8] sm:$0xff]
          %414 = vst [vmem:[%s406 + $0x8] sm:$0xff] %v413
          %v415 = vld [vmem:[%s405 + $0x10] sm:$0xff]
          %416 = vst [vmem:[%s406 + $0x10] sm:$0xff] %v415
          %v417 = vld [vmem:[%s405 + $0x18] sm:$0xff]
          %418 = vst [vmem:[%s406 + $0x18] sm:$0xff] %v417
          %v419 = vld [vmem:[%s405 + $0x20] sm:$0xff]
          %420 = vst [vmem:[%s406 + $0x20] sm:$0xff] %v419
          %v421 = vld [vmem:[%s405 + $0x28] sm:$0xff]
          %422 = vst [vmem:[%s406 + $0x28] sm:$0xff] %v421
          %v423 = vld [vmem:[%s405 + $0x30] sm:$0xff]
          %424 = vst [vmem:[%s406 + $0x30] sm:$0xff] %v423
          %v425 = vld [vmem:[%s405 + $0x38] sm:$0xff]
          %426 = vst [vmem:[%s406 + $0x38] sm:$0xff] %v425
        $region50: #{custom-call.8} parent=44 // loop_footer
          %s427 = scalar_lea.vmem %s405, 64
          %s428 = scalar_lea.vmem %s406, 64
          %v429 = vld [vmem:[%s405 + $0x40] sm:$0xff]
        $region51: #{custom-call.8} parent=44 // loop_footer_branch
          %430 = sbr.rel target = $region47
        $region52: #{custom-call.8} parent=44 // loop_exit
          _
        // While loop
        $region53: #{custom-call.8} parent=44 // loop_pre_header
          _
        $region54: #{custom-call.8} parent=44 // loop_header
          %s431 = sphi %s405, %s439
          %s432 = sphi %s406, %s440
          %v433 = vphi %v407, %v433
          %p434 = scmp.gt.s32.totalorder %s431, %s403
        $region55: #{custom-call.8} parent=44 // loop_header_branch
          %436 = sbr.rel (%p434) target = $region59
        $region56: #{custom-call.8} parent=44 // loop_body
          %v437 = vld [vmem:[%s431] sm:$0xff]
          %438 = vst [vmem:[%s432] sm:$0xff] %v437
        $region57: #{custom-call.8} parent=44 // loop_footer
          %s439 = scalar_lea.vmem %s431, 8
          %s440 = scalar_lea.vmem %s432, 8
        $region58: #{custom-call.8} parent=44 // loop_footer_branch
          %441 = sbr.rel target = $region54
        $region59: #{custom-call.8} parent=44 // loop_exit
          _
      $region45: #{custom-call.8} parent=40 // pred_fallthru
        _
      %s443 = ssub.s32 1, 1
      %s444 = smul.u32 4, 8
      %s445 = scalar_lea.vmem %s1, %s444
      %s446 = smul.u32 4, 8
      %s447 = scalar_lea.vmem [#allocation1], %s446
      %v448 = vld [vmem:[%s447] sm:%s443]
      %449 = vst [vmem:[%s445] sm:%s443] %v448
    $region41: #{custom-call.8} parent=1 // pred_fallthru
      _
    // Predicated region
    $region60: #{custom-call.8} parent=1 // pred_check
      _
    $region61: #{custom-call.8} parent=1 // pred_check_branch
      %451 = sbr.rel (0) target = $region63
    $region62: #{custom-call.8} parent=1 // pred_region
      %453 = vsyncadd [#allocation4], 0
      %s455 = sshll.u32 [#allocation3], 4
      %s456 = int_to_ptr.vmem [resolvable:$true] %s455
      %s457 = sshll.u32 %s2, 4
      %s458 = int_to_ptr.hbm [resolvable:$true] %s457
      %460 = dma.vmem_to_hbm [thread:$0]  %s456, 16, %s458, [#allocation4]
    $region63: #{custom-call.8} parent=1 // pred_fallthru
      _
    // Predicated region
    $region64: #{custom-call.8} parent=1 // pred_check
      _
    $region65: #{custom-call.8} parent=1 // pred_check_branch
      %462 = sbr.rel (0) target = $region67
    $region66: #{custom-call.8} parent=1 // pred_region
      // Predicated region
      $region68: #{custom-call.8} parent=66 // pred_check
        _
      $region69: #{custom-call.8} parent=66 // pred_check_branch
        %464 = sbr.rel (0) target = $region71
      $region70: #{custom-call.8} parent=66 // pred_region
        %p466 = scmp.gt.s32.totalorder 0, 0
        // Predicated region
        $region72: #{custom-call.8} parent=70 // pred_check
          %p467 = pneg %p466
        $region73: #{custom-call.8} parent=70 // pred_check_branch
          %469 = sbr.rel (%p467) target = $region75
        $region74: #{custom-call.8} parent=70 // pred_region
          %s470 = ssub.s32 0, 1
          %s471 = smul.u32 %s470, 8
          %s472 = scalar_lea.vmem [#allocation6], %s471
          %v473 = vld [vmem:[#allocation6] sm:$0xff]
          // While loop
          $region76: #{custom-call.8} parent=74 // loop_pre_header
            _
          $region77: #{custom-call.8} parent=74 // loop_header
            %s474 = sphi [#allocation6], %s496
            %s475 = sphi %s3, %s497
            %v476 = vphi %v473, %v498
            %s477 = ssub.s32 %s472, 64
            %p478 = scmp.gt.s32.totalorder %s474, %s477
          $region78: #{custom-call.8} parent=74 // loop_header_branch
            %480 = sbr.rel (%p478) target = $region82
          $region79: #{custom-call.8} parent=74 // loop_body
            %481 = vst [vmem:[%s475] sm:$0xff] %v476
            %v482 = vld [vmem:[%s474 + $0x8] sm:$0xff]
            %483 = vst [vmem:[%s475 + $0x8] sm:$0xff] %v482
            %v484 = vld [vmem:[%s474 + $0x10] sm:$0xff]
            %485 = vst [vmem:[%s475 + $0x10] sm:$0xff] %v484
            %v486 = vld [vmem:[%s474 + $0x18] sm:$0xff]
            %487 = vst [vmem:[%s475 + $0x18] sm:$0xff] %v486
            %v488 = vld [vmem:[%s474 + $0x20] sm:$0xff]
            %489 = vst [vmem:[%s475 + $0x20] sm:$0xff] %v488
            %v490 = vld [vmem:[%s474 + $0x28] sm:$0xff]
            %491 = vst [vmem:[%s475 + $0x28] sm:$0xff] %v490
            %v492 = vld [vmem:[%s474 + $0x30] sm:$0xff]
            %493 = vst [vmem:[%s475 + $0x30] sm:$0xff] %v492
            %v494 = vld [vmem:[%s474 + $0x38] sm:$0xff]
            %495 = vst [vmem:[%s475 + $0x38] sm:$0xff] %v494
          $region80: #{custom-call.8} parent=74 // loop_footer
            %s496 = scalar_lea.vmem %s474, 64
            %s497 = scalar_lea.vmem %s475, 64
            %v498 = vld [vmem:[%s474 + $0x40] sm:$0xff]
          $region81: #{custom-call.8} parent=74 // loop_footer_branch
            %499 = sbr.rel target = $region77
          $region82: #{custom-call.8} parent=74 // loop_exit
            _
          // While loop
          $region83: #{custom-call.8} parent=74 // loop_pre_header
            _
          $region84: #{custom-call.8} parent=74 // loop_header
            %s500 = sphi %s474, %s508
            %s501 = sphi %s475, %s509
            %v502 = vphi %v476, %v502
            %p503 = scmp.gt.s32.totalorder %s500, %s472
          $region85: #{custom-call.8} parent=74 // loop_header_branch
            %505 = sbr.rel (%p503) target = $region89
          $region86: #{custom-call.8} parent=74 // loop_body
            %v506 = vld [vmem:[%s500] sm:$0xff]
            %507 = vst [vmem:[%s501] sm:$0xff] %v506
          $region87: #{custom-call.8} parent=74 // loop_footer
            %s508 = scalar_lea.vmem %s500, 8
            %s509 = scalar_lea.vmem %s501, 8
          $region88: #{custom-call.8} parent=74 // loop_footer_branch
            %510 = sbr.rel target = $region84
          $region89: #{custom-call.8} parent=74 // loop_exit
            _
        $region75: #{custom-call.8} parent=70 // pred_fallthru
          _
        %s512 = ssub.s32 2, 1
        %s513 = smul.u32 0, 8
        %s514 = scalar_lea.vmem %s3, %s513
        %s515 = smul.u32 0, 8
        %s516 = scalar_lea.vmem [#allocation6], %s515
        %v517 = vld [vmem:[%s516] sm:%s512]
        %518 = vst [vmem:[%s514] sm:%s512] %v517
      $region71: #{custom-call.8} parent=66 // pred_fallthru
        _
    $region67: #{custom-call.8} parent=1 // pred_fallthru
      _
    // Predicated region
    $region90: #{custom-call.8} parent=1 // pred_check
      _
    $region91: #{custom-call.8} parent=1 // pred_check_branch
      %520 = sbr.rel (0) target = $region93
    $region92: #{custom-call.8} parent=1 // pred_region
      %522 = dma.done [#allocation4], 16
    $region93: #{custom-call.8} parent=1 // pred_fallthru
      _
    // Predicated region
    $region94: #{custom-call.8} parent=1 // pred_check
      _
    $region95: #{custom-call.8} parent=1 // pred_check_branch
      %524 = sbr.rel (0) target = $region97
    $region96: #{custom-call.8} parent=1 // pred_region
      _
    $region97: #{custom-call.8} parent=1 // pred_fallthru
      _
    %525 = vsyncpa [#allocation4], 1

// kernel: custom-call.10
$region0: #{custom-call.10}
  %s0 = inlined_call_operand.vmem [shape: f32[1,32,32], index: 0, kind: input, shape index: {}]
  %s1 = inlined_call_operand.vmem [shape: f32[1,32,32], index: 1, kind: output, shape index: {}]
  $region1: #{custom-call.10} parent=0
    #allocation0 [shape = 'u8[16384]{0}', space=vmem, size = 0x4000, scoped, tag = 'operand span for operand 0']
    #allocation1 [shape = 'u8[16384]{0}', space=vmem, size = 0x4000, scoped, tag = 'operand span for operand 1']
    #allocation2 [shape = 'f32[32,32]{1,0}', space=vmem, size = 0x4000, scoped, tag = 'rescaled input a']
    // Predicated region
    $region2: #{custom-call.10} parent=1 // pred_check
      _
    $region3: #{custom-call.10} parent=1 // pred_check_branch
      %3 = sbr.rel (0) target = $region5
    $region4: #{custom-call.10} parent=1 // pred_region
      // Predicated region
      $region6: #{custom-call.10} parent=4 // pred_check
        _
      $region7: #{custom-call.10} parent=4 // pred_check_branch
        %5 = sbr.rel (0) target = $region9
      $region8: #{custom-call.10} parent=4 // pred_region
        // Predicated region
        $region21: #{custom-call.10} parent=8 // pred_check
          _
        $region22: #{custom-call.10} parent=8 // pred_check_branch
          %27 = sbr.rel (0) target = $region24
        $region23: #{custom-call.10} parent=8 // pred_region
          loop: start=0, step=1, limit=1
          $region25: #{custom-call.10} parent=23 // loop_pre_header
            _
          $region26: #{custom-call.10} parent=23 // loop_header
            %s29 = sphi 0, %s33
            %p30 = scmp.ge.s32.totalorder %s29, 1
            %s34 = sphi %s0, %s0
            %s35 = sphi [#allocation0], [#allocation0]
          $region27: #{custom-call.10} parent=23 // loop_header_branch
            %32 = sbr.rel (%p30) target = $region31
          $region28: #{custom-call.10} parent=23 // loop_body
            %v36 = vld [vmem:[%s34] sm:$0xff]
            %37 = vst [vmem:[%s35] sm:$0xff] %v36
            %v38 = vld [vmem:[%s34 + $0x8] sm:$0xff]
            %39 = vst [vmem:[%s35 + $0x8] sm:$0xff] %v38
            %v40 = vld [vmem:[%s34 + $0x10] sm:$0xff]
            %41 = vst [vmem:[%s35 + $0x10] sm:$0xff] %v40
            %v42 = vld [vmem:[%s34 + $0x18] sm:$0xff]
            %43 = vst [vmem:[%s35 + $0x18] sm:$0xff] %v42
          $region29: #{custom-call.10} parent=23 // loop_footer
            %s33 = sadd.s32 1, %s29
          $region30: #{custom-call.10} parent=23 // loop_footer_branch
            %28 = sbr.rel target = $region26
          $region31: #{custom-call.10} parent=23 // loop_exit
            _
        $region24: #{custom-call.10} parent=8 // pred_fallthru
          _
        // Predicated region
        $region32: #{custom-call.10} parent=8 // pred_check
          _
        $region33: #{custom-call.10} parent=8 // pred_check_branch
          %45 = sbr.rel target = $region35
        $region34: #{custom-call.10} parent=8 // pred_region
          _
        $region35: #{custom-call.10} parent=8 // pred_fallthru
          _
      $region9: #{custom-call.10} parent=4 // pred_fallthru
        _
      // Predicated region
      $region10: #{custom-call.10} parent=4 // pred_check
        _
      $region11: #{custom-call.10} parent=4 // pred_check_branch
        %7 = sbr.rel target = $region13
      $region12: #{custom-call.10} parent=4 // pred_region
        %s9 = ssub.s32 256, 1
        loop: start=0, step=1, limit=1
        $region14: #{custom-call.10} parent=12 // loop_pre_header
          _
        $region15: #{custom-call.10} parent=12 // loop_header
          %s11 = sphi 0, %s15
          %p12 = scmp.ge.s32.totalorder %s11, 1
          %s16 = sphi %s0, %s0
          %s17 = sphi [#allocation0], [#allocation0]
        $region16: #{custom-call.10} parent=12 // loop_header_branch
          %14 = sbr.rel (%p12) target = $region20
        $region17: #{custom-call.10} parent=12 // loop_body
          %v18 = vld [vmem:[%s16] sm:%s9]
          %19 = vst [vmem:[%s17] sm:%s9] %v18
          %v20 = vld [vmem:[%s16 + $0x8] sm:%s9]
          %21 = vst [vmem:[%s17 + $0x8] sm:%s9] %v20
          %v22 = vld [vmem:[%s16 + $0x10] sm:%s9]
          %23 = vst [vmem:[%s17 + $0x10] sm:%s9] %v22
          %v24 = vld [vmem:[%s16 + $0x18] sm:%s9]
          %25 = vst [vmem:[%s17 + $0x18] sm:%s9] %v24
        $region18: #{custom-call.10} parent=12 // loop_footer
          %s15 = sadd.s32 1, %s11
        $region19: #{custom-call.10} parent=12 // loop_footer_branch
          %10 = sbr.rel target = $region15
        $region20: #{custom-call.10} parent=12 // loop_exit
          _
      $region13: #{custom-call.10} parent=4 // pred_fallthru
        _
    $region5: #{custom-call.10} parent=1 // pred_fallthru
      _
    %46 = vnop
    %v47 = vlaneseq
    %v48 = vand.u32 %v47, 127
    %vm49 = vcmp.lt.s32.totalorder %v48, 32
    %v50 = vlaneseq
    %v51 = vshrl.u32 %v50, 7
    %vm53 = vcmp.eq.s32.totalorder %v51, %v48
    %v54 = vld [vmem:[#allocation0] sm:$0xff]
    %v55 = vsel %vm53, %v54, 0.0
    %56 = vadd.xlane.f32.xlu0 %v55
    %v57 = vpop.xlane.xlu0 %56
    %vm58 = vcmp.ge.s32.totalorder %v51, %v48
    %vm59 = vmand %vm58, %vm49
    %v60 = vsel %vm59, %v54, 0.0
    %v61 = vrcp.pop %v57
    %v62 = vmul.f32 %v57, %v61
    %v63 = vsub.f32 1.0, %v62
    %v64 = vmul.f32 %v61, %v63
    %v65 = vadd.f32 %v61, %v64
    %vm66 = vweird.f32 %v57
    %vm67 = vweird.f32 %v61
    %vm68 = vmor %vm66, %vm67
    %v69 = vsel %vm68, %v61, %v65
    %v70 = vand.u32 2147483647, %v57
    %vm71 = vcmp.eq.f32.partialorder %v70, 8.507059e+37
    %v72 = vand.u32 %v57, 2147483648
    %v73 = vor.u32 1.1754944e-38, %v72
    %v74 = vsel %vm71, %v73, %v69
    %v75 = vmul.f32 %v60, %v74
    %76 = vst [vmem:[#allocation2] sm:$0xff] %v75
    %s77 = scalar_lea.vmem [#allocation0], 8
    %s78 = scalar_lea.vmem [#allocation2], 8
    %v79 = vlaneseq
    %v80 = vshrl.u32 %v79, 7
    %v81 = vadd.s32 %v80, 8
    %vm82 = vcmp.eq.s32.totalorder %v81, %v48
    %v83 = vld [vmem:[%s77] sm:$0xff]
    %v84 = vsel %vm82, %v83, 0.0
    %85 = vadd.xlane.f32.xlu0 %v84
    %v86 = vpop.xlane.xlu0 %85
    %vm87 = vcmp.ge.s32.totalorder %v81, %v48
    %vm88 = vmand %vm87, %vm49
    %v89 = vsel %vm88, %v83, 0.0
    %v90 = vrcp.pop %v86
    %v91 = vmul.f32 %v86, %v90
    %v92 = vsub.f32 1.0, %v91
    %v93 = vmul.f32 %v90, %v92
    %v94 = vadd.f32 %v90, %v93
    %vm95 = vweird.f32 %v86
    %vm96 = vweird.f32 %v90
    %vm97 = vmor %vm95, %vm96
    %v98 = vsel %vm97, %v90, %v94
    %v99 = vand.u32 2147483647, %v86
    %vm100 = vcmp.eq.f32.partialorder %v99, 8.507059e+37
    %v101 = vand.u32 %v86, 2147483648
    %v102 = vor.u32 1.1754944e-38, %v101
    %v103 = vsel %vm100, %v102, %v98
    %v104 = vmul.f32 %v89, %v103
    %105 = vst [vmem:[%s78] sm:$0xff] %v104
    %s106 = scalar_lea.vmem [#allocation0], 16
    %s107 = scalar_lea.vmem [#allocation2], 16
    %v108 = vlaneseq
    %v109 = vshrl.u32 %v108, 7
    %v110 = vadd.s32 %v109, 16
    %vm111 = vcmp.eq.s32.totalorder %v110, %v48
    %v112 = vld [vmem:[%s106] sm:$0xff]
    %v113 = vsel %vm111, %v112, 0.0
    %114 = vadd.xlane.f32.xlu0 %v113
    %v115 = vpop.xlane.xlu0 %114
    %vm116 = vcmp.ge.s32.totalorder %v110, %v48
    %vm117 = vmand %vm116, %vm49
    %v118 = vsel %vm117, %v112, 0.0
    %v119 = vrcp.pop %v115
    %v120 = vmul.f32 %v115, %v119
    %v121 = vsub.f32 1.0, %v120
    %v122 = vmul.f32 %v119, %v121
    %v123 = vadd.f32 %v119, %v122
    %vm124 = vweird.f32 %v115
    %vm125 = vweird.f32 %v119
    %vm126 = vmor %vm124, %vm125
    %v127 = vsel %vm126, %v119, %v123
    %v128 = vand.u32 2147483647, %v115
    %vm129 = vcmp.eq.f32.partialorder %v128, 8.507059e+37
    %v130 = vand.u32 %v115, 2147483648
    %v131 = vor.u32 1.1754944e-38, %v130
    %v132 = vsel %vm129, %v131, %v127
    %v133 = vmul.f32 %v118, %v132
    %134 = vst [vmem:[%s107] sm:$0xff] %v133
    %s135 = scalar_lea.vmem [#allocation0], 24
    %s136 = scalar_lea.vmem [#allocation2], 24
    %v137 = vlaneseq
    %v138 = vshrl.u32 %v137, 7
    %v139 = vadd.s32 %v138, 24
    %vm140 = vcmp.eq.s32.totalorder %v139, %v48
    %v141 = vld [vmem:[%s135] sm:$0xff]
    %v142 = vsel %vm140, %v141, 0.0
    %143 = vadd.xlane.f32.xlu0 %v142
    %v144 = vpop.xlane.xlu0 %143
    %vm145 = vcmp.ge.s32.totalorder %v139, %v48
    %vm146 = vmand %vm145, %vm49
    %v147 = vsel %vm146, %v141, 0.0
    %v148 = vrcp.pop %v144
    %v149 = vmul.f32 %v144, %v148
    %v150 = vsub.f32 1.0, %v149
    %v151 = vmul.f32 %v148, %v150
    %v152 = vadd.f32 %v148, %v151
    %vm153 = vweird.f32 %v144
    %vm154 = vweird.f32 %v148
    %vm155 = vmor %vm153, %vm154
    %v156 = vsel %vm155, %v148, %v152
    %v157 = vand.u32 2147483647, %v144
    %vm158 = vcmp.eq.f32.partialorder %v157, 8.507059e+37
    %v159 = vand.u32 %v144, 2147483648
    %v160 = vor.u32 1.1754944e-38, %v159
    %v161 = vsel %vm158, %v160, %v156
    %v162 = vmul.f32 %v147, %v161
    %163 = vst [vmem:[%s136] sm:$0xff] %v162
    %v164 = vlaneseq
    %v165 = vand.u32 %v164, 127
    %v166 = vlaneseq
    %v167 = vshrl.u32 %v166, 7
    %vm169 = vcmp.eq.s32.totalorder %v165, %v167
    %v170 = vlaneseq
    %v171 = vand.u32 %v170, 127
    %vm172 = vcmp.eq.s32.totalorder %v171, 0
    %v173 = vsel %vm172, 1.0, -1.0
    %v174 = vsel %vm169, %v173, 0.0
    %v175 = vlaneseq
    %v176 = vand.u32 %v175, 127
    %v177 = vlaneseq
    %v178 = vshrl.u32 %v177, 7
    %v179 = vadd.s32 %v178, 8
    %vm180 = vcmp.eq.s32.totalorder %v176, %v179
    %v181 = vsel %vm180, -1.0, 0.0
    %v182 = vlaneseq
    %v183 = vand.u32 %v182, 127
    %v184 = vlaneseq
    %v185 = vshrl.u32 %v184, 7
    %v186 = vadd.s32 %v185, 16
    %vm187 = vcmp.eq.s32.totalorder %v183, %v186
    %v188 = vsel %vm187, -1.0, 0.0
    %v189 = vlaneseq
    %v190 = vand.u32 %v189, 127
    %v191 = vlaneseq
    %v192 = vshrl.u32 %v191, 7
    %v193 = vadd.s32 %v192, 24
    %vm194 = vcmp.eq.s32.totalorder %v190, %v193
    %v195 = vsel %vm194, -1.0, 0.0
    %s196 = scalar_lea.vmem [#allocation2], 1
    %v197 = vld [vmem:[%s196] ss:$0 sm:$0xff]
    %v198 = vxor.u32 %v197, 2147483648
    %v199 = vlaneseq
    %v200 = vand.u32 %v199, 127
    %vm201 = vcmp.eq.s32.totalorder %v200, 1
    %v202 = vmul.f32 %v198, %v174
    %203 = vadd.xlane.f32.xlu0 %v202
    %v204 = vpop.xlane.xlu0 %203
    %v205 = vsel %vm201, %v204, %v174
    %s206 = scalar_lea.vmem [#allocation2], 2
    %v207 = vld [vmem:[%s206] ss:$0 sm:$0xff]
    %v208 = vxor.u32 %v207, 2147483648
    %v209 = vlaneseq
    %v210 = vand.u32 %v209, 127
    %vm211 = vcmp.eq.s32.totalorder %v210, 2
    %v212 = vmul.f32 %v208, %v205
    %213 = vadd.xlane.f32.xlu0 %v212
    %v214 = vpop.xlane.xlu0 %213
    %v215 = vsel %vm211, %v214, %v205
    %s216 = scalar_lea.vmem [#allocation2], 3
    %v217 = vld [vmem:[%s216] ss:$0 sm:$0xff]
    %v218 = vxor.u32 %v217, 2147483648
    %v219 = vlaneseq
    %v220 = vand.u32 %v219, 127
    %vm221 = vcmp.eq.s32.totalorder %v220, 3
    %v222 = vmul.f32 %v218, %v215
    %223 = vadd.xlane.f32.xlu0 %v222
    %v224 = vpop.xlane.xlu0 %223
    %v225 = vsel %vm221, %v224, %v215
    %s226 = scalar_lea.vmem [#allocation2], 4
    %v227 = vld [vmem:[%s226] ss:$0 sm:$0xff]
    %v228 = vxor.u32 %v227, 2147483648
    %v229 = vlaneseq
    %v230 = vand.u32 %v229, 127
    %vm231 = vcmp.eq.s32.totalorder %v230, 4
    %v232 = vmul.f32 %v228, %v225
    %233 = vadd.xlane.f32.xlu0 %v232
    %v234 = vpop.xlane.xlu0 %233
    %v235 = vsel %vm231, %v234, %v225
    %s236 = scalar_lea.vmem [#allocation2], 5
    %v237 = vld [vmem:[%s236] ss:$0 sm:$0xff]
    %v238 = vxor.u32 %v237, 2147483648
    %v239 = vlaneseq
    %v240 = vand.u32 %v239, 127
    %vm241 = vcmp.eq.s32.totalorder %v240, 5
    %v242 = vmul.f32 %v238, %v235
    %243 = vadd.xlane.f32.xlu0 %v242
    %v244 = vpop.xlane.xlu0 %243
    %v245 = vsel %vm241, %v244, %v235
    %s246 = scalar_lea.vmem [#allocation2], 6
    %v247 = vld [vmem:[%s246] ss:$0 sm:$0xff]
    %v248 = vxor.u32 %v247, 2147483648
    %v249 = vlaneseq
    %v250 = vand.u32 %v249, 127
    %vm251 = vcmp.eq.s32.totalorder %v250, 6
    %v252 = vmul.f32 %v248, %v245
    %253 = vadd.xlane.f32.xlu0 %v252
    %v254 = vpop.xlane.xlu0 %253
    %v255 = vsel %vm251, %v254, %v245
    %s256 = scalar_lea.vmem [#allocation2], 7
    %v257 = vld [vmem:[%s256] ss:$0 sm:$0xff]
    %v258 = vxor.u32 %v257, 2147483648
    %v259 = vlaneseq
    %v260 = vand.u32 %v259, 127
    %vm261 = vcmp.eq.s32.totalorder %v260, 7
    %v262 = vmul.f32 %v258, %v255
    %263 = vadd.xlane.f32.xlu0 %v262
    %v264 = vpop.xlane.xlu0 %263
    %v265 = vsel %vm261, %v264, %v255
    %s266 = scalar_lea.vmem [#allocation2], 8
    %v267 = vld [vmem:[%s266] ss:$0 sm:$0xff]
    %v268 = vxor.u32 %v267, 2147483648
    %v269 = vlaneseq
    %v270 = vand.u32 %v269, 127
    %vm271 = vcmp.eq.s32.totalorder %v270, 8
    %v272 = vmul.f32 %v268, %v265
    %273 = vadd.xlane.f32.xlu0 %v272
    %v274 = vpop.xlane.xlu0 %273
    %v275 = vsel %vm271, %v274, %v265
    %v276 = vmul.f32 %v268, %v181
    %277 = vadd.xlane.f32.xlu0 %v276
    %v278 = vpop.xlane.xlu0 %277
    %v279 = vsel %vm271, %v278, %v181
    %s280 = scalar_lea.vmem [#allocation2], 9
    %v281 = vld [vmem:[%s280] ss:$0 sm:$0xff]
    %v282 = vxor.u32 %v281, 2147483648
    %v283 = vlaneseq
    %v284 = vand.u32 %v283, 127
    %vm285 = vcmp.eq.s32.totalorder %v284, 9
    %v286 = vmul.f32 %v282, %v275
    %287 = vadd.xlane.f32.xlu0 %v286
    %v288 = vpop.xlane.xlu0 %287
    %v289 = vsel %vm285, %v288, %v275
    %v290 = vmul.f32 %v282, %v279
    %291 = vadd.xlane.f32.xlu0 %v290
    %v292 = vpop.xlane.xlu0 %291
    %v293 = vsel %vm285, %v292, %v279
    %s294 = scalar_lea.vmem [#allocation2], 10
    %v295 = vld [vmem:[%s294] ss:$0 sm:$0xff]
    %v296 = vxor.u32 %v295, 2147483648
    %v297 = vlaneseq
    %v298 = vand.u32 %v297, 127
    %vm299 = vcmp.eq.s32.totalorder %v298, 10
    %v300 = vmul.f32 %v296, %v289
    %301 = vadd.xlane.f32.xlu0 %v300
    %v302 = vpop.xlane.xlu0 %301
    %v303 = vsel %vm299, %v302, %v289
    %v304 = vmul.f32 %v296, %v293
    %305 = vadd.xlane.f32.xlu0 %v304
    %v306 = vpop.xlane.xlu0 %305
    %v307 = vsel %vm299, %v306, %v293
    %s308 = scalar_lea.vmem [#allocation2], 11
    %v309 = vld [vmem:[%s308] ss:$0 sm:$0xff]
    %v310 = vxor.u32 %v309, 2147483648
    %v311 = vlaneseq
    %v312 = vand.u32 %v311, 127
    %vm313 = vcmp.eq.s32.totalorder %v312, 11
    %v314 = vmul.f32 %v310, %v303
    %315 = vadd.xlane.f32.xlu0 %v314
    %v316 = vpop.xlane.xlu0 %315
    %v317 = vsel %vm313, %v316, %v303
    %v318 = vmul.f32 %v310, %v307
    %319 = vadd.xlane.f32.xlu0 %v318
    %v320 = vpop.xlane.xlu0 %319
    %v321 = vsel %vm313, %v320, %v307
    %s322 = scalar_lea.vmem [#allocation2], 12
    %v323 = vld [vmem:[%s322] ss:$0 sm:$0xff]
    %v324 = vxor.u32 %v323, 2147483648
    %v325 = vlaneseq
    %v326 = vand.u32 %v325, 127
    %vm327 = vcmp.eq.s32.totalorder %v326, 12
    %v328 = vmul.f32 %v324, %v317
    %329 = vadd.xlane.f32.xlu0 %v328
    %v330 = vpop.xlane.xlu0 %329
    %v331 = vsel %vm327, %v330, %v317
    %v332 = vmul.f32 %v324, %v321
    %333 = vadd.xlane.f32.xlu0 %v332
    %v334 = vpop.xlane.xlu0 %333
    %v335 = vsel %vm327, %v334, %v321
    %s336 = scalar_lea.vmem [#allocation2], 13
    %v337 = vld [vmem:[%s336] ss:$0 sm:$0xff]
    %v338 = vxor.u32 %v337, 2147483648
    %v339 = vlaneseq
    %v340 = vand.u32 %v339, 127
    %vm341 = vcmp.eq.s32.totalorder %v340, 13
    %v342 = vmul.f32 %v338, %v331
    %343 = vadd.xlane.f32.xlu0 %v342
    %v344 = vpop.xlane.xlu0 %343
    %v345 = vsel %vm341, %v344, %v331
    %v346 = vmul.f32 %v338, %v335
    %347 = vadd.xlane.f32.xlu0 %v346
    %v348 = vpop.xlane.xlu0 %347
    %v349 = vsel %vm341, %v348, %v335
    %s350 = scalar_lea.vmem [#allocation2], 14
    %v351 = vld [vmem:[%s350] ss:$0 sm:$0xff]
    %v352 = vxor.u32 %v351, 2147483648
    %v353 = vlaneseq
    %v354 = vand.u32 %v353, 127
    %vm355 = vcmp.eq.s32.totalorder %v354, 14
    %v356 = vmul.f32 %v352, %v345
    %357 = vadd.xlane.f32.xlu0 %v356
    %v358 = vpop.xlane.xlu0 %357
    %v359 = vsel %vm355, %v358, %v345
    %v360 = vmul.f32 %v352, %v349
    %361 = vadd.xlane.f32.xlu0 %v360
    %v362 = vpop.xlane.xlu0 %361
    %v363 = vsel %vm355, %v362, %v349
    %s364 = scalar_lea.vmem [#allocation2], 15
    %v365 = vld [vmem:[%s364] ss:$0 sm:$0xff]
    %v366 = vxor.u32 %v365, 2147483648
    %v367 = vlaneseq
    %v368 = vand.u32 %v367, 127
    %vm369 = vcmp.eq.s32.totalorder %v368, 15
    %v370 = vmul.f32 %v366, %v359
    %371 = vadd.xlane.f32.xlu0 %v370
    %v372 = vpop.xlane.xlu0 %371
    %v373 = vsel %vm369, %v372, %v359
    %v374 = vmul.f32 %v366, %v363
    %375 = vadd.xlane.f32.xlu0 %v374
    %v376 = vpop.xlane.xlu0 %375
    %v377 = vsel %vm369, %v376, %v363
    %s378 = scalar_lea.vmem [#allocation2], 16
    %v379 = vld [vmem:[%s378] ss:$0 sm:$0xff]
    %v380 = vxor.u32 %v379, 2147483648
    %v381 = vlaneseq
    %v382 = vand.u32 %v381, 127
    %vm383 = vcmp.eq.s32.totalorder %v382, 16
    %v384 = vmul.f32 %v380, %v373
    %385 = vadd.xlane.f32.xlu0 %v384
    %v386 = vpop.xlane.xlu0 %385
    %v387 = vsel %vm383, %v386, %v373
    %v388 = vmul.f32 %v380, %v377
    %389 = vadd.xlane.f32.xlu0 %v388
    %v390 = vpop.xlane.xlu0 %389
    %v391 = vsel %vm383, %v390, %v377
    %v392 = vmul.f32 %v380, %v188
    %393 = vadd.xlane.f32.xlu0 %v392
    %v394 = vpop.xlane.xlu0 %393
    %v395 = vsel %vm383, %v394, %v188
    %s396 = scalar_lea.vmem [#allocation2], 17
    %v397 = vld [vmem:[%s396] ss:$0 sm:$0xff]
    %v398 = vxor.u32 %v397, 2147483648
    %v399 = vlaneseq
    %v400 = vand.u32 %v399, 127
    %vm401 = vcmp.eq.s32.totalorder %v400, 17
    %v402 = vmul.f32 %v398, %v387
    %403 = vadd.xlane.f32.xlu0 %v402
    %v404 = vpop.xlane.xlu0 %403
    %v405 = vsel %vm401, %v404, %v387
    %v406 = vmul.f32 %v398, %v391
    %407 = vadd.xlane.f32.xlu0 %v406
    %v408 = vpop.xlane.xlu0 %407
    %v409 = vsel %vm401, %v408, %v391
    %v410 = vmul.f32 %v398, %v395
    %411 = vadd.xlane.f32.xlu0 %v410
    %v412 = vpop.xlane.xlu0 %411
    %v413 = vsel %vm401, %v412, %v395
    %s414 = scalar_lea.vmem [#allocation2], 18
    %v415 = vld [vmem:[%s414] ss:$0 sm:$0xff]
    %v416 = vxor.u32 %v415, 2147483648
    %v417 = vlaneseq
    %v418 = vand.u32 %v417, 127
    %vm419 = vcmp.eq.s32.totalorder %v418, 18
    %v420 = vmul.f32 %v416, %v405
    %421 = vadd.xlane.f32.xlu0 %v420
    %v422 = vpop.xlane.xlu0 %421
    %v423 = vsel %vm419, %v422, %v405
    %v424 = vmul.f32 %v416, %v409
    %425 = vadd.xlane.f32.xlu0 %v424
    %v426 = vpop.xlane.xlu0 %425
    %v427 = vsel %vm419, %v426, %v409
    %v428 = vmul.f32 %v416, %v413
    %429 = vadd.xlane.f32.xlu0 %v428
    %v430 = vpop.xlane.xlu0 %429
    %v431 = vsel %vm419, %v430, %v413
    %s432 = scalar_lea.vmem [#allocation2], 19
    %v433 = vld [vmem:[%s432] ss:$0 sm:$0xff]
    %v434 = vxor.u32 %v433, 2147483648
    %v435 = vlaneseq
    %v436 = vand.u32 %v435, 127
    %vm437 = vcmp.eq.s32.totalorder %v436, 19
    %v438 = vmul.f32 %v434, %v423
    %439 = vadd.xlane.f32.xlu0 %v438
    %v440 = vpop.xlane.xlu0 %439
    %v441 = vsel %vm437, %v440, %v423
    %v442 = vmul.f32 %v434, %v427
    %443 = vadd.xlane.f32.xlu0 %v442
    %v444 = vpop.xlane.xlu0 %443
    %v445 = vsel %vm437, %v444, %v427
    %v446 = vmul.f32 %v434, %v431
    %447 = vadd.xlane.f32.xlu0 %v446
    %v448 = vpop.xlane.xlu0 %447
    %v449 = vsel %vm437, %v448, %v431
    %s450 = scalar_lea.vmem [#allocation2], 20
    %v451 = vld [vmem:[%s450] ss:$0 sm:$0xff]
    %v452 = vxor.u32 %v451, 2147483648
    %v453 = vlaneseq
    %v454 = vand.u32 %v453, 127
    %vm455 = vcmp.eq.s32.totalorder %v454, 20
    %v456 = vmul.f32 %v452, %v441
    %457 = vadd.xlane.f32.xlu0 %v456
    %v458 = vpop.xlane.xlu0 %457
    %v459 = vsel %vm455, %v458, %v441
    %v460 = vmul.f32 %v452, %v445
    %461 = vadd.xlane.f32.xlu0 %v460
    %v462 = vpop.xlane.xlu0 %461
    %v463 = vsel %vm455, %v462, %v445
    %v464 = vmul.f32 %v452, %v449
    %465 = vadd.xlane.f32.xlu0 %v464
    %v466 = vpop.xlane.xlu0 %465
    %v467 = vsel %vm455, %v466, %v449
    %s468 = scalar_lea.vmem [#allocation2], 21
    %v469 = vld [vmem:[%s468] ss:$0 sm:$0xff]
    %v470 = vxor.u32 %v469, 2147483648
    %v471 = vlaneseq
    %v472 = vand.u32 %v471, 127
    %vm473 = vcmp.eq.s32.totalorder %v472, 21
    %v474 = vmul.f32 %v470, %v459
    %475 = vadd.xlane.f32.xlu0 %v474
    %v476 = vpop.xlane.xlu0 %475
    %v477 = vsel %vm473, %v476, %v459
    %v478 = vmul.f32 %v470, %v463
    %479 = vadd.xlane.f32.xlu0 %v478
    %v480 = vpop.xlane.xlu0 %479
    %v481 = vsel %vm473, %v480, %v463
    %v482 = vmul.f32 %v470, %v467
    %483 = vadd.xlane.f32.xlu0 %v482
    %v484 = vpop.xlane.xlu0 %483
    %v485 = vsel %vm473, %v484, %v467
    %s486 = scalar_lea.vmem [#allocation2], 22
    %v487 = vld [vmem:[%s486] ss:$0 sm:$0xff]
    %v488 = vxor.u32 %v487, 2147483648
    %v489 = vlaneseq
    %v490 = vand.u32 %v489, 127
    %vm491 = vcmp.eq.s32.totalorder %v490, 22
    %v492 = vmul.f32 %v488, %v477
    %493 = vadd.xlane.f32.xlu0 %v492
    %v494 = vpop.xlane.xlu0 %493
    %v495 = vsel %vm491, %v494, %v477
    %v496 = vmul.f32 %v488, %v481
    %497 = vadd.xlane.f32.xlu0 %v496
    %v498 = vpop.xlane.xlu0 %497
    %v499 = vsel %vm491, %v498, %v481
    %v500 = vmul.f32 %v488, %v485
    %501 = vadd.xlane.f32.xlu0 %v500
    %v502 = vpop.xlane.xlu0 %501
    %v503 = vsel %vm491, %v502, %v485
    %s504 = scalar_lea.vmem [#allocation2], 23
    %v505 = vld [vmem:[%s504] ss:$0 sm:$0xff]
    %v506 = vxor.u32 %v505, 2147483648
    %v507 = vlaneseq
    %v508 = vand.u32 %v507, 127
    %vm509 = vcmp.eq.s32.totalorder %v508, 23
    %v510 = vmul.f32 %v506, %v495
    %511 = vadd.xlane.f32.xlu0 %v510
    %v512 = vpop.xlane.xlu0 %511
    %v513 = vsel %vm509, %v512, %v495
    %v514 = vmul.f32 %v506, %v499
    %515 = vadd.xlane.f32.xlu0 %v514
    %v516 = vpop.xlane.xlu0 %515
    %v517 = vsel %vm509, %v516, %v499
    %v518 = vmul.f32 %v506, %v503
    %519 = vadd.xlane.f32.xlu0 %v518
    %v520 = vpop.xlane.xlu0 %519
    %v521 = vsel %vm509, %v520, %v503
    %s522 = scalar_lea.vmem [#allocation2], 24
    %v523 = vld [vmem:[%s522] ss:$0 sm:$0xff]
    %v524 = vxor.u32 %v523, 2147483648
    %v525 = vlaneseq
    %v526 = vand.u32 %v525, 127
    %vm527 = vcmp.eq.s32.totalorder %v526, 24
    %v528 = vmul.f32 %v524, %v513
    %529 = vadd.xlane.f32.xlu0 %v528
    %v530 = vpop.xlane.xlu0 %529
    %v531 = vsel %vm527, %v530, %v513
    %v532 = vmul.f32 %v524, %v517
    %533 = vadd.xlane.f32.xlu0 %v532
    %v534 = vpop.xlane.xlu0 %533
    %v535 = vsel %vm527, %v534, %v517
    %v536 = vmul.f32 %v524, %v521
    %537 = vadd.xlane.f32.xlu0 %v536
    %v538 = vpop.xlane.xlu0 %537
    %v539 = vsel %vm527, %v538, %v521
    %v540 = vmul.f32 %v524, %v195
    %541 = vadd.xlane.f32.xlu0 %v540
    %v542 = vpop.xlane.xlu0 %541
    %v543 = vsel %vm527, %v542, %v195
    %s544 = scalar_lea.vmem [#allocation2], 25
    %v545 = vld [vmem:[%s544] ss:$0 sm:$0xff]
    %v546 = vxor.u32 %v545, 2147483648
    %v547 = vlaneseq
    %v548 = vand.u32 %v547, 127
    %vm549 = vcmp.eq.s32.totalorder %v548, 25
    %v550 = vmul.f32 %v546, %v531
    %551 = vadd.xlane.f32.xlu0 %v550
    %v552 = vpop.xlane.xlu0 %551
    %v553 = vsel %vm549, %v552, %v531
    %v554 = vmul.f32 %v546, %v535
    %555 = vadd.xlane.f32.xlu0 %v554
    %v556 = vpop.xlane.xlu0 %555
    %v557 = vsel %vm549, %v556, %v535
    %v558 = vmul.f32 %v546, %v539
    %559 = vadd.xlane.f32.xlu0 %v558
    %v560 = vpop.xlane.xlu0 %559
    %v561 = vsel %vm549, %v560, %v539
    %v562 = vmul.f32 %v546, %v543
    %563 = vadd.xlane.f32.xlu0 %v562
    %v564 = vpop.xlane.xlu0 %563
    %v565 = vsel %vm549, %v564, %v543
    %s566 = scalar_lea.vmem [#allocation2], 26
    %v567 = vld [vmem:[%s566] ss:$0 sm:$0xff]
    %v568 = vxor.u32 %v567, 2147483648
    %v569 = vlaneseq
    %v570 = vand.u32 %v569, 127
    %vm571 = vcmp.eq.s32.totalorder %v570, 26
    %v572 = vmul.f32 %v568, %v553
    %573 = vadd.xlane.f32.xlu0 %v572
    %v574 = vpop.xlane.xlu0 %573
    %v575 = vsel %vm571, %v574, %v553
    %v576 = vmul.f32 %v568, %v557
    %577 = vadd.xlane.f32.xlu0 %v576
    %v578 = vpop.xlane.xlu0 %577
    %v579 = vsel %vm571, %v578, %v557
    %v580 = vmul.f32 %v568, %v561
    %581 = vadd.xlane.f32.xlu0 %v580
    %v582 = vpop.xlane.xlu0 %581
    %v583 = vsel %vm571, %v582, %v561
    %v584 = vmul.f32 %v568, %v565
    %585 = vadd.xlane.f32.xlu0 %v584
    %v586 = vpop.xlane.xlu0 %585
    %v587 = vsel %vm571, %v586, %v565
    %s588 = scalar_lea.vmem [#allocation2], 27
    %v589 = vld [vmem:[%s588] ss:$0 sm:$0xff]
    %v590 = vxor.u32 %v589, 2147483648
    %v591 = vlaneseq
    %v592 = vand.u32 %v591, 127
    %vm593 = vcmp.eq.s32.totalorder %v592, 27
    %v594 = vmul.f32 %v590, %v575
    %595 = vadd.xlane.f32.xlu0 %v594
    %v596 = vpop.xlane.xlu0 %595
    %v597 = vsel %vm593, %v596, %v575
    %v598 = vmul.f32 %v590, %v579
    %599 = vadd.xlane.f32.xlu0 %v598
    %v600 = vpop.xlane.xlu0 %599
    %v601 = vsel %vm593, %v600, %v579
    %v602 = vmul.f32 %v590, %v583
    %603 = vadd.xlane.f32.xlu0 %v602
    %v604 = vpop.xlane.xlu0 %603
    %v605 = vsel %vm593, %v604, %v583
    %v606 = vmul.f32 %v590, %v587
    %607 = vadd.xlane.f32.xlu0 %v606
    %v608 = vpop.xlane.xlu0 %607
    %v609 = vsel %vm593, %v608, %v587
    %s610 = scalar_lea.vmem [#allocation2], 28
    %v611 = vld [vmem:[%s610] ss:$0 sm:$0xff]
    %v612 = vxor.u32 %v611, 2147483648
    %v613 = vlaneseq
    %v614 = vand.u32 %v613, 127
    %vm615 = vcmp.eq.s32.totalorder %v614, 28
    %v616 = vmul.f32 %v612, %v597
    %617 = vadd.xlane.f32.xlu0 %v616
    %v618 = vpop.xlane.xlu0 %617
    %v619 = vsel %vm615, %v618, %v597
    %v620 = vmul.f32 %v612, %v601
    %621 = vadd.xlane.f32.xlu0 %v620
    %v622 = vpop.xlane.xlu0 %621
    %v623 = vsel %vm615, %v622, %v601
    %v624 = vmul.f32 %v612, %v605
    %625 = vadd.xlane.f32.xlu0 %v624
    %v626 = vpop.xlane.xlu0 %625
    %v627 = vsel %vm615, %v626, %v605
    %v628 = vmul.f32 %v612, %v609
    %629 = vadd.xlane.f32.xlu0 %v628
    %v630 = vpop.xlane.xlu0 %629
    %v631 = vsel %vm615, %v630, %v609
    %s632 = scalar_lea.vmem [#allocation2], 29
    %v633 = vld [vmem:[%s632] ss:$0 sm:$0xff]
    %v634 = vxor.u32 %v633, 2147483648
    %v635 = vlaneseq
    %v636 = vand.u32 %v635, 127
    %vm637 = vcmp.eq.s32.totalorder %v636, 29
    %v638 = vmul.f32 %v634, %v619
    %639 = vadd.xlane.f32.xlu0 %v638
    %v640 = vpop.xlane.xlu0 %639
    %v641 = vsel %vm637, %v640, %v619
    %v642 = vmul.f32 %v634, %v623
    %643 = vadd.xlane.f32.xlu0 %v642
    %v644 = vpop.xlane.xlu0 %643
    %v645 = vsel %vm637, %v644, %v623
    %v646 = vmul.f32 %v634, %v627
    %647 = vadd.xlane.f32.xlu0 %v646
    %v648 = vpop.xlane.xlu0 %647
    %v649 = vsel %vm637, %v648, %v627
    %v650 = vmul.f32 %v634, %v631
    %651 = vadd.xlane.f32.xlu0 %v650
    %v652 = vpop.xlane.xlu0 %651
    %v653 = vsel %vm637, %v652, %v631
    %s654 = scalar_lea.vmem [#allocation2], 30
    %v655 = vld [vmem:[%s654] ss:$0 sm:$0xff]
    %v656 = vxor.u32 %v655, 2147483648
    %v657 = vlaneseq
    %v658 = vand.u32 %v657, 127
    %vm659 = vcmp.eq.s32.totalorder %v658, 30
    %v660 = vmul.f32 %v656, %v641
    %661 = vadd.xlane.f32.xlu0 %v660
    %v662 = vpop.xlane.xlu0 %661
    %v663 = vsel %vm659, %v662, %v641
    %v664 = vmul.f32 %v656, %v645
    %665 = vadd.xlane.f32.xlu0 %v664
    %v666 = vpop.xlane.xlu0 %665
    %v667 = vsel %vm659, %v666, %v645
    %v668 = vmul.f32 %v656, %v649
    %669 = vadd.xlane.f32.xlu0 %v668
    %v670 = vpop.xlane.xlu0 %669
    %v671 = vsel %vm659, %v670, %v649
    %v672 = vmul.f32 %v656, %v653
    %673 = vadd.xlane.f32.xlu0 %v672
    %v674 = vpop.xlane.xlu0 %673
    %v675 = vsel %vm659, %v674, %v653
    %s676 = scalar_lea.vmem [#allocation2], 31
    %v677 = vld [vmem:[%s676] ss:$0 sm:$0xff]
    %v678 = vxor.u32 %v677, 2147483648
    %v679 = vlaneseq
    %v680 = vand.u32 %v679, 127
    %vm681 = vcmp.eq.s32.totalorder %v680, 31
    %v682 = vmul.f32 %v678, %v663
    %683 = vadd.xlane.f32.xlu0 %v682
    %v684 = vpop.xlane.xlu0 %683
    %v685 = vsel %vm681, %v684, %v663
    %v686 = vmul.f32 %v678, %v667
    %687 = vadd.xlane.f32.xlu0 %v686
    %v688 = vpop.xlane.xlu0 %687
    %v689 = vsel %vm681, %v688, %v667
    %v690 = vmul.f32 %v678, %v671
    %691 = vadd.xlane.f32.xlu0 %v690
    %v692 = vpop.xlane.xlu0 %691
    %v693 = vsel %vm681, %v692, %v671
    %v694 = vmul.f32 %v678, %v675
    %695 = vadd.xlane.f32.xlu0 %v694
    %v696 = vpop.xlane.xlu0 %695
    %v697 = vsel %vm681, %v696, %v675
    %v698 = vrcp.pop %v57
    %v699 = vmul.f32 %v57, %v698
    %v700 = vsub.f32 1.0, %v699
    %v701 = vmul.f32 %v698, %v700
    %v702 = vadd.f32 %v698, %v701
    %vm703 = vweird.f32 %v57
    %vm704 = vweird.f32 %v698
    %vm705 = vmor %vm703, %vm704
    %v706 = vsel %vm705, %v698, %v702
    %v707 = vand.u32 2147483647, %v57
    %vm708 = vcmp.eq.f32.partialorder %v707, 8.507059e+37
    %v709 = vand.u32 %v57, 2147483648
    %v710 = vor.u32 1.1754944e-38, %v709
    %v711 = vsel %vm708, %v710, %v706
    %v712 = vmul.f32 %v685, %v711
    %vm713 = vweird.f32 %v57
    %v714 = vsel %vm713, %v685, %v712
    %715 = vst [vmem:[#allocation1] sm:$0xff] %v714
    %v716 = vrcp.pop %v86
    %v717 = vmul.f32 %v86, %v716
    %v718 = vsub.f32 1.0, %v717
    %v719 = vmul.f32 %v716, %v718
    %v720 = vadd.f32 %v716, %v719
    %vm721 = vweird.f32 %v86
    %vm722 = vweird.f32 %v716
    %vm723 = vmor %vm721, %vm722
    %v724 = vsel %vm723, %v716, %v720
    %v725 = vand.u32 2147483647, %v86
    %vm726 = vcmp.eq.f32.partialorder %v725, 8.507059e+37
    %v727 = vand.u32 %v86, 2147483648
    %v728 = vor.u32 1.1754944e-38, %v727
    %v729 = vsel %vm726, %v728, %v724
    %v730 = vmul.f32 %v689, %v729
    %vm731 = vweird.f32 %v86
    %v732 = vsel %vm731, %v689, %v730
    %s733 = scalar_lea.vmem [#allocation1], 8
    %734 = vst [vmem:[%s733] sm:$0xff] %v732
    %v735 = vrcp.pop %v115
    %v736 = vmul.f32 %v115, %v735
    %v737 = vsub.f32 1.0, %v736
    %v738 = vmul.f32 %v735, %v737
    %v739 = vadd.f32 %v735, %v738
    %vm740 = vweird.f32 %v115
    %vm741 = vweird.f32 %v735
    %vm742 = vmor %vm740, %vm741
    %v743 = vsel %vm742, %v735, %v739
    %v744 = vand.u32 2147483647, %v115
    %vm745 = vcmp.eq.f32.partialorder %v744, 8.507059e+37
    %v746 = vand.u32 %v115, 2147483648
    %v747 = vor.u32 1.1754944e-38, %v746
    %v748 = vsel %vm745, %v747, %v743
    %v749 = vmul.f32 %v693, %v748
    %vm750 = vweird.f32 %v115
    %v751 = vsel %vm750, %v693, %v749
    %s752 = scalar_lea.vmem [#allocation1], 16
    %753 = vst [vmem:[%s752] sm:$0xff] %v751
    %v754 = vrcp.pop %v144
    %v755 = vmul.f32 %v144, %v754
    %v756 = vsub.f32 1.0, %v755
    %v757 = vmul.f32 %v754, %v756
    %v758 = vadd.f32 %v754, %v757
    %vm759 = vweird.f32 %v144
    %vm760 = vweird.f32 %v754
    %vm761 = vmor %vm759, %vm760
    %v762 = vsel %vm761, %v754, %v758
    %v763 = vand.u32 2147483647, %v144
    %vm764 = vcmp.eq.f32.partialorder %v763, 8.507059e+37
    %v765 = vand.u32 %v144, 2147483648
    %v766 = vor.u32 1.1754944e-38, %v765
    %v767 = vsel %vm764, %v766, %v762
    %v768 = vmul.f32 %v697, %v767
    %vm769 = vweird.f32 %v144
    %v770 = vsel %vm769, %v697, %v768
    %s771 = scalar_lea.vmem [#allocation1], 24
    %772 = vst [vmem:[%s771] sm:$0xff] %v770
    // Predicated region
    $region36: #{custom-call.10} parent=1 // pred_check
      _
    $region37: #{custom-call.10} parent=1 // pred_check_branch
      %774 = sbr.rel (0) target = $region39
    $region38: #{custom-call.10} parent=1 // pred_region
      // Predicated region
      $region40: #{custom-call.10} parent=38 // pred_check
        _
      $region41: #{custom-call.10} parent=38 // pred_check_branch
        %776 = sbr.rel (0) target = $region43
      $region42: #{custom-call.10} parent=38 // pred_region
        // Predicated region
        $region55: #{custom-call.10} parent=42 // pred_check
          _
        $region56: #{custom-call.10} parent=42 // pred_check_branch
          %798 = sbr.rel (0) target = $region58
        $region57: #{custom-call.10} parent=42 // pred_region
          loop: start=0, step=1, limit=1
          $region59: #{custom-call.10} parent=57 // loop_pre_header
            _
          $region60: #{custom-call.10} parent=57 // loop_header
            %s800 = sphi 0, %s804
            %p801 = scmp.ge.s32.totalorder %s800, 1
            %s805 = sphi [#allocation1], [#allocation1]
            %s806 = sphi %s1, %s1
          $region61: #{custom-call.10} parent=57 // loop_header_branch
            %803 = sbr.rel (%p801) target = $region65
          $region62: #{custom-call.10} parent=57 // loop_body
            %v807 = vld [vmem:[%s805] sm:$0xff]
            %808 = vst [vmem:[%s806] sm:$0xff] %v807
            %v809 = vld [vmem:[%s805 + $0x8] sm:$0xff]
            %810 = vst [vmem:[%s806 + $0x8] sm:$0xff] %v809
            %v811 = vld [vmem:[%s805 + $0x10] sm:$0xff]
            %812 = vst [vmem:[%s806 + $0x10] sm:$0xff] %v811
            %v813 = vld [vmem:[%s805 + $0x18] sm:$0xff]
            %814 = vst [vmem:[%s806 + $0x18] sm:$0xff] %v813
          $region63: #{custom-call.10} parent=57 // loop_footer
            %s804 = sadd.s32 1, %s800
          $region64: #{custom-call.10} parent=57 // loop_footer_branch
            %799 = sbr.rel target = $region60
          $region65: #{custom-call.10} parent=57 // loop_exit
            _
        $region58: #{custom-call.10} parent=42 // pred_fallthru
          _
        // Predicated region
        $region66: #{custom-call.10} parent=42 // pred_check
          _
        $region67: #{custom-call.10} parent=42 // pred_check_branch
          %816 = sbr.rel target = $region69
        $region68: #{custom-call.10} parent=42 // pred_region
          _
        $region69: #{custom-call.10} parent=42 // pred_fallthru
          _
      $region43: #{custom-call.10} parent=38 // pred_fallthru
        _
      // Predicated region
      $region44: #{custom-call.10} parent=38 // pred_check
        _
      $region45: #{custom-call.10} parent=38 // pred_check_branch
        %778 = sbr.rel target = $region47
      $region46: #{custom-call.10} parent=38 // pred_region
        %s780 = ssub.s32 256, 1
        loop: start=0, step=1, limit=1
        $region48: #{custom-call.10} parent=46 // loop_pre_header
          _
        $region49: #{custom-call.10} parent=46 // loop_header
          %s782 = sphi 0, %s786
          %p783 = scmp.ge.s32.totalorder %s782, 1
          %s787 = sphi [#allocation1], [#allocation1]
          %s788 = sphi %s1, %s1
        $region50: #{custom-call.10} parent=46 // loop_header_branch
          %785 = sbr.rel (%p783) target = $region54
        $region51: #{custom-call.10} parent=46 // loop_body
          %v789 = vld [vmem:[%s787] sm:%s780]
          %790 = vst [vmem:[%s788] sm:%s780] %v789
          %v791 = vld [vmem:[%s787 + $0x8] sm:%s780]
          %792 = vst [vmem:[%s788 + $0x8] sm:%s780] %v791
          %v793 = vld [vmem:[%s787 + $0x10] sm:%s780]
          %794 = vst [vmem:[%s788 + $0x10] sm:%s780] %v793
          %v795 = vld [vmem:[%s787 + $0x18] sm:%s780]
          %796 = vst [vmem:[%s788 + $0x18] sm:%s780] %v795
        $region52: #{custom-call.10} parent=46 // loop_footer
          %s786 = sadd.s32 1, %s782
        $region53: #{custom-call.10} parent=46 // loop_footer_branch
          %781 = sbr.rel target = $region49
        $region54: #{custom-call.10} parent=46 // loop_exit
          _
      $region47: #{custom-call.10} parent=38 // pred_fallthru
        _
    $region39: #{custom-call.10} parent=1 // pred_fallthru
      _
    %817 = vnop

// kernel: custom-call.9
$region0: #{custom-call.9}
  %s0 = inlined_call_operand.vmem [shape: f32[1,32,32], index: 0, kind: input, shape index: {}]
  %s1 = inlined_call_operand.vmem [shape: f32[1,32,32], index: 1, kind: output, shape index: {}]
  $region1: #{custom-call.9} parent=0
    #allocation0 [shape = 'u8[16384]{0}', space=vmem, size = 0x4000, scoped, tag = 'operand span for operand 0']
    #allocation1 [shape = 'u8[16384]{0}', space=vmem, size = 0x4000, scoped, tag = 'operand span for operand 1']
    #allocation2 [shape = 'f32[32,32]{1,0}', space=vmem, size = 0x4000, scoped, tag = 'rescaled input a']
    // Predicated region
    $region2: #{custom-call.9} parent=1 // pred_check
      _
    $region3: #{custom-call.9} parent=1 // pred_check_branch
      %3 = sbr.rel (0) target = $region5
    $region4: #{custom-call.9} parent=1 // pred_region
      // Predicated region
      $region6: #{custom-call.9} parent=4 // pred_check
        _
      $region7: #{custom-call.9} parent=4 // pred_check_branch
        %5 = sbr.rel (0) target = $region9
      $region8: #{custom-call.9} parent=4 // pred_region
        // Predicated region
        $region21: #{custom-call.9} parent=8 // pred_check
          _
        $region22: #{custom-call.9} parent=8 // pred_check_branch
          %27 = sbr.rel (0) target = $region24
        $region23: #{custom-call.9} parent=8 // pred_region
          loop: start=0, step=1, limit=1
          $region25: #{custom-call.9} parent=23 // loop_pre_header
            _
          $region26: #{custom-call.9} parent=23 // loop_header
            %s29 = sphi 0, %s33
            %p30 = scmp.ge.s32.totalorder %s29, 1
            %s34 = sphi %s0, %s0
            %s35 = sphi [#allocation0], [#allocation0]
          $region27: #{custom-call.9} parent=23 // loop_header_branch
            %32 = sbr.rel (%p30) target = $region31
          $region28: #{custom-call.9} parent=23 // loop_body
            %v36 = vld [vmem:[%s34] sm:$0xff]
            %37 = vst [vmem:[%s35] sm:$0xff] %v36
            %v38 = vld [vmem:[%s34 + $0x8] sm:$0xff]
            %39 = vst [vmem:[%s35 + $0x8] sm:$0xff] %v38
            %v40 = vld [vmem:[%s34 + $0x10] sm:$0xff]
            %41 = vst [vmem:[%s35 + $0x10] sm:$0xff] %v40
            %v42 = vld [vmem:[%s34 + $0x18] sm:$0xff]
            %43 = vst [vmem:[%s35 + $0x18] sm:$0xff] %v42
          $region29: #{custom-call.9} parent=23 // loop_footer
            %s33 = sadd.s32 1, %s29
          $region30: #{custom-call.9} parent=23 // loop_footer_branch
            %28 = sbr.rel target = $region26
          $region31: #{custom-call.9} parent=23 // loop_exit
            _
        $region24: #{custom-call.9} parent=8 // pred_fallthru
          _
        // Predicated region
        $region32: #{custom-call.9} parent=8 // pred_check
          _
        $region33: #{custom-call.9} parent=8 // pred_check_branch
          %45 = sbr.rel target = $region35
        $region34: #{custom-call.9} parent=8 // pred_region
          _
        $region35: #{custom-call.9} parent=8 // pred_fallthru
          _
      $region9: #{custom-call.9} parent=4 // pred_fallthru
        _
      // Predicated region
      $region10: #{custom-call.9} parent=4 // pred_check
        _
      $region11: #{custom-call.9} parent=4 // pred_check_branch
        %7 = sbr.rel target = $region13
      $region12: #{custom-call.9} parent=4 // pred_region
        %s9 = ssub.s32 256, 1
        loop: start=0, step=1, limit=1
        $region14: #{custom-call.9} parent=12 // loop_pre_header
          _
        $region15: #{custom-call.9} parent=12 // loop_header
          %s11 = sphi 0, %s15
          %p12 = scmp.ge.s32.totalorder %s11, 1
          %s16 = sphi %s0, %s0
          %s17 = sphi [#allocation0], [#allocation0]
        $region16: #{custom-call.9} parent=12 // loop_header_branch
          %14 = sbr.rel (%p12) target = $region20
        $region17: #{custom-call.9} parent=12 // loop_body
          %v18 = vld [vmem:[%s16] sm:%s9]
          %19 = vst [vmem:[%s17] sm:%s9] %v18
          %v20 = vld [vmem:[%s16 + $0x8] sm:%s9]
          %21 = vst [vmem:[%s17 + $0x8] sm:%s9] %v20
          %v22 = vld [vmem:[%s16 + $0x10] sm:%s9]
          %23 = vst [vmem:[%s17 + $0x10] sm:%s9] %v22
          %v24 = vld [vmem:[%s16 + $0x18] sm:%s9]
          %25 = vst [vmem:[%s17 + $0x18] sm:%s9] %v24
        $region18: #{custom-call.9} parent=12 // loop_footer
          %s15 = sadd.s32 1, %s11
        $region19: #{custom-call.9} parent=12 // loop_footer_branch
          %10 = sbr.rel target = $region15
        $region20: #{custom-call.9} parent=12 // loop_exit
          _
      $region13: #{custom-call.9} parent=4 // pred_fallthru
        _
    $region5: #{custom-call.9} parent=1 // pred_fallthru
      _
    %46 = vnop
    %v47 = vlaneseq
    %v48 = vand.u32 %v47, 127
    %vm49 = vcmp.lt.s32.totalorder %v48, 32
    %v50 = vlaneseq
    %v51 = vshrl.u32 %v50, 7
    %vm53 = vcmp.eq.s32.totalorder %v51, %v48
    %v54 = vld [vmem:[#allocation0] sm:$0xff]
    %v55 = vsel %vm53, %v54, 0.0
    %56 = vadd.xlane.f32.xlu0 %v55
    %v57 = vpop.xlane.xlu0 %56
    %vm58 = vcmp.le.s32.totalorder %v51, %v48
    %vm59 = vmand %vm58, %vm49
    %v60 = vsel %vm59, %v54, 0.0
    %v61 = vrcp.pop %v57
    %v62 = vmul.f32 %v57, %v61
    %v63 = vsub.f32 1.0, %v62
    %v64 = vmul.f32 %v61, %v63
    %v65 = vadd.f32 %v61, %v64
    %vm66 = vweird.f32 %v57
    %vm67 = vweird.f32 %v61
    %vm68 = vmor %vm66, %vm67
    %v69 = vsel %vm68, %v61, %v65
    %v70 = vand.u32 2147483647, %v57
    %vm71 = vcmp.eq.f32.partialorder %v70, 8.507059e+37
    %v72 = vand.u32 %v57, 2147483648
    %v73 = vor.u32 1.1754944e-38, %v72
    %v74 = vsel %vm71, %v73, %v69
    %v75 = vmul.f32 %v60, %v74
    %76 = vst [vmem:[#allocation2] sm:$0xff] %v75
    %s77 = scalar_lea.vmem [#allocation0], 8
    %s78 = scalar_lea.vmem [#allocation2], 8
    %v79 = vlaneseq
    %v80 = vshrl.u32 %v79, 7
    %v81 = vadd.s32 %v80, 8
    %vm82 = vcmp.eq.s32.totalorder %v81, %v48
    %v83 = vld [vmem:[%s77] sm:$0xff]
    %v84 = vsel %vm82, %v83, 0.0
    %85 = vadd.xlane.f32.xlu0 %v84
    %v86 = vpop.xlane.xlu0 %85
    %vm87 = vcmp.le.s32.totalorder %v81, %v48
    %vm88 = vmand %vm87, %vm49
    %v89 = vsel %vm88, %v83, 0.0
    %v90 = vrcp.pop %v86
    %v91 = vmul.f32 %v86, %v90
    %v92 = vsub.f32 1.0, %v91
    %v93 = vmul.f32 %v90, %v92
    %v94 = vadd.f32 %v90, %v93
    %vm95 = vweird.f32 %v86
    %vm96 = vweird.f32 %v90
    %vm97 = vmor %vm95, %vm96
    %v98 = vsel %vm97, %v90, %v94
    %v99 = vand.u32 2147483647, %v86
    %vm100 = vcmp.eq.f32.partialorder %v99, 8.507059e+37
    %v101 = vand.u32 %v86, 2147483648
    %v102 = vor.u32 1.1754944e-38, %v101
    %v103 = vsel %vm100, %v102, %v98
    %v104 = vmul.f32 %v89, %v103
    %105 = vst [vmem:[%s78] sm:$0xff] %v104
    %s106 = scalar_lea.vmem [#allocation0], 16
    %s107 = scalar_lea.vmem [#allocation2], 16
    %v108 = vlaneseq
    %v109 = vshrl.u32 %v108, 7
    %v110 = vadd.s32 %v109, 16
    %vm111 = vcmp.eq.s32.totalorder %v110, %v48
    %v112 = vld [vmem:[%s106] sm:$0xff]
    %v113 = vsel %vm111, %v112, 0.0
    %114 = vadd.xlane.f32.xlu0 %v113
    %v115 = vpop.xlane.xlu0 %114
    %vm116 = vcmp.le.s32.totalorder %v110, %v48
    %vm117 = vmand %vm116, %vm49
    %v118 = vsel %vm117, %v112, 0.0
    %v119 = vrcp.pop %v115
    %v120 = vmul.f32 %v115, %v119
    %v121 = vsub.f32 1.0, %v120
    %v122 = vmul.f32 %v119, %v121
    %v123 = vadd.f32 %v119, %v122
    %vm124 = vweird.f32 %v115
    %vm125 = vweird.f32 %v119
    %vm126 = vmor %vm124, %vm125
    %v127 = vsel %vm126, %v119, %v123
    %v128 = vand.u32 2147483647, %v115
    %vm129 = vcmp.eq.f32.partialorder %v128, 8.507059e+37
    %v130 = vand.u32 %v115, 2147483648
    %v131 = vor.u32 1.1754944e-38, %v130
    %v132 = vsel %vm129, %v131, %v127
    %v133 = vmul.f32 %v118, %v132
    %134 = vst [vmem:[%s107] sm:$0xff] %v133
    %s135 = scalar_lea.vmem [#allocation0], 24
    %s136 = scalar_lea.vmem [#allocation2], 24
    %v137 = vlaneseq
    %v138 = vshrl.u32 %v137, 7
    %v139 = vadd.s32 %v138, 24
    %vm140 = vcmp.eq.s32.totalorder %v139, %v48
    %v141 = vld [vmem:[%s135] sm:$0xff]
    %v142 = vsel %vm140, %v141, 0.0
    %143 = vadd.xlane.f32.xlu0 %v142
    %v144 = vpop.xlane.xlu0 %143
    %vm145 = vcmp.le.s32.totalorder %v139, %v48
    %vm146 = vmand %vm145, %vm49
    %v147 = vsel %vm146, %v141, 0.0
    %v148 = vrcp.pop %v144
    %v149 = vmul.f32 %v144, %v148
    %v150 = vsub.f32 1.0, %v149
    %v151 = vmul.f32 %v148, %v150
    %v152 = vadd.f32 %v148, %v151
    %vm153 = vweird.f32 %v144
    %vm154 = vweird.f32 %v148
    %vm155 = vmor %vm153, %vm154
    %v156 = vsel %vm155, %v148, %v152
    %v157 = vand.u32 2147483647, %v144
    %vm158 = vcmp.eq.f32.partialorder %v157, 8.507059e+37
    %v159 = vand.u32 %v144, 2147483648
    %v160 = vor.u32 1.1754944e-38, %v159
    %v161 = vsel %vm158, %v160, %v156
    %v162 = vmul.f32 %v147, %v161
    %163 = vst [vmem:[%s136] sm:$0xff] %v162
    %v164 = vlaneseq
    %v165 = vand.u32 %v164, 127
    %v166 = vlaneseq
    %v167 = vshrl.u32 %v166, 7
    %vm169 = vcmp.eq.s32.totalorder %v165, %v167
    %v170 = vsel %vm169, -1.0, 0.0
    %v171 = vlaneseq
    %v172 = vand.u32 %v171, 127
    %v173 = vlaneseq
    %v174 = vshrl.u32 %v173, 7
    %v175 = vadd.s32 %v174, 8
    %vm176 = vcmp.eq.s32.totalorder %v172, %v175
    %v177 = vsel %vm176, -1.0, 0.0
    %v178 = vlaneseq
    %v179 = vand.u32 %v178, 127
    %v180 = vlaneseq
    %v181 = vshrl.u32 %v180, 7
    %v182 = vadd.s32 %v181, 16
    %vm183 = vcmp.eq.s32.totalorder %v179, %v182
    %v184 = vsel %vm183, -1.0, 0.0
    %v185 = vlaneseq
    %v186 = vand.u32 %v185, 127
    %v187 = vlaneseq
    %v188 = vshrl.u32 %v187, 7
    %v189 = vadd.s32 %v188, 24
    %vm190 = vcmp.eq.s32.totalorder %v186, %v189
    %v191 = vlaneseq
    %v192 = vand.u32 %v191, 127
    %vm193 = vcmp.eq.s32.totalorder %v192, 31
    %v194 = vsel %vm193, 1.0, -1.0
    %v195 = vsel %vm190, %v194, 0.0
    %s196 = scalar_lea.vmem [#allocation2], 30
    %v197 = vld [vmem:[%s196] ss:$0 sm:$0xff]
    %v198 = vxor.u32 %v197, 2147483648
    %v199 = vlaneseq
    %v200 = vand.u32 %v199, 127
    %vm201 = vcmp.eq.s32.totalorder %v200, 30
    %v202 = vmul.f32 %v198, %v195
    %203 = vadd.xlane.f32.xlu0 %v202
    %v204 = vpop.xlane.xlu0 %203
    %v205 = vsel %vm201, %v204, %v195
    %s206 = scalar_lea.vmem [#allocation2], 29
    %v207 = vld [vmem:[%s206] ss:$0 sm:$0xff]
    %v208 = vxor.u32 %v207, 2147483648
    %v209 = vlaneseq
    %v210 = vand.u32 %v209, 127
    %vm211 = vcmp.eq.s32.totalorder %v210, 29
    %v212 = vmul.f32 %v208, %v205
    %213 = vadd.xlane.f32.xlu0 %v212
    %v214 = vpop.xlane.xlu0 %213
    %v215 = vsel %vm211, %v214, %v205
    %s216 = scalar_lea.vmem [#allocation2], 28
    %v217 = vld [vmem:[%s216] ss:$0 sm:$0xff]
    %v218 = vxor.u32 %v217, 2147483648
    %v219 = vlaneseq
    %v220 = vand.u32 %v219, 127
    %vm221 = vcmp.eq.s32.totalorder %v220, 28
    %v222 = vmul.f32 %v218, %v215
    %223 = vadd.xlane.f32.xlu0 %v222
    %v224 = vpop.xlane.xlu0 %223
    %v225 = vsel %vm221, %v224, %v215
    %s226 = scalar_lea.vmem [#allocation2], 27
    %v227 = vld [vmem:[%s226] ss:$0 sm:$0xff]
    %v228 = vxor.u32 %v227, 2147483648
    %v229 = vlaneseq
    %v230 = vand.u32 %v229, 127
    %vm231 = vcmp.eq.s32.totalorder %v230, 27
    %v232 = vmul.f32 %v228, %v225
    %233 = vadd.xlane.f32.xlu0 %v232
    %v234 = vpop.xlane.xlu0 %233
    %v235 = vsel %vm231, %v234, %v225
    %s236 = scalar_lea.vmem [#allocation2], 26
    %v237 = vld [vmem:[%s236] ss:$0 sm:$0xff]
    %v238 = vxor.u32 %v237, 2147483648
    %v239 = vlaneseq
    %v240 = vand.u32 %v239, 127
    %vm241 = vcmp.eq.s32.totalorder %v240, 26
    %v242 = vmul.f32 %v238, %v235
    %243 = vadd.xlane.f32.xlu0 %v242
    %v244 = vpop.xlane.xlu0 %243
    %v245 = vsel %vm241, %v244, %v235
    %s246 = scalar_lea.vmem [#allocation2], 25
    %v247 = vld [vmem:[%s246] ss:$0 sm:$0xff]
    %v248 = vxor.u32 %v247, 2147483648
    %v249 = vlaneseq
    %v250 = vand.u32 %v249, 127
    %vm251 = vcmp.eq.s32.totalorder %v250, 25
    %v252 = vmul.f32 %v248, %v245
    %253 = vadd.xlane.f32.xlu0 %v252
    %v254 = vpop.xlane.xlu0 %253
    %v255 = vsel %vm251, %v254, %v245
    %s256 = scalar_lea.vmem [#allocation2], 24
    %v257 = vld [vmem:[%s256] ss:$0 sm:$0xff]
    %v258 = vxor.u32 %v257, 2147483648
    %v259 = vlaneseq
    %v260 = vand.u32 %v259, 127
    %vm261 = vcmp.eq.s32.totalorder %v260, 24
    %v262 = vmul.f32 %v258, %v255
    %263 = vadd.xlane.f32.xlu0 %v262
    %v264 = vpop.xlane.xlu0 %263
    %v265 = vsel %vm261, %v264, %v255
    %s266 = scalar_lea.vmem [#allocation2], 23
    %v267 = vld [vmem:[%s266] ss:$0 sm:$0xff]
    %v268 = vxor.u32 %v267, 2147483648
    %v269 = vlaneseq
    %v270 = vand.u32 %v269, 127
    %vm271 = vcmp.eq.s32.totalorder %v270, 23
    %v272 = vmul.f32 %v268, %v184
    %273 = vadd.xlane.f32.xlu0 %v272
    %v274 = vpop.xlane.xlu0 %273
    %v275 = vsel %vm271, %v274, %v184
    %v276 = vmul.f32 %v268, %v265
    %277 = vadd.xlane.f32.xlu0 %v276
    %v278 = vpop.xlane.xlu0 %277
    %v279 = vsel %vm271, %v278, %v265
    %s280 = scalar_lea.vmem [#allocation2], 22
    %v281 = vld [vmem:[%s280] ss:$0 sm:$0xff]
    %v282 = vxor.u32 %v281, 2147483648
    %v283 = vlaneseq
    %v284 = vand.u32 %v283, 127
    %vm285 = vcmp.eq.s32.totalorder %v284, 22
    %v286 = vmul.f32 %v282, %v275
    %287 = vadd.xlane.f32.xlu0 %v286
    %v288 = vpop.xlane.xlu0 %287
    %v289 = vsel %vm285, %v288, %v275
    %v290 = vmul.f32 %v282, %v279
    %291 = vadd.xlane.f32.xlu0 %v290
    %v292 = vpop.xlane.xlu0 %291
    %v293 = vsel %vm285, %v292, %v279
    %s294 = scalar_lea.vmem [#allocation2], 21
    %v295 = vld [vmem:[%s294] ss:$0 sm:$0xff]
    %v296 = vxor.u32 %v295, 2147483648
    %v297 = vlaneseq
    %v298 = vand.u32 %v297, 127
    %vm299 = vcmp.eq.s32.totalorder %v298, 21
    %v300 = vmul.f32 %v296, %v289
    %301 = vadd.xlane.f32.xlu0 %v300
    %v302 = vpop.xlane.xlu0 %301
    %v303 = vsel %vm299, %v302, %v289
    %v304 = vmul.f32 %v296, %v293
    %305 = vadd.xlane.f32.xlu0 %v304
    %v306 = vpop.xlane.xlu0 %305
    %v307 = vsel %vm299, %v306, %v293
    %s308 = scalar_lea.vmem [#allocation2], 20
    %v309 = vld [vmem:[%s308] ss:$0 sm:$0xff]
    %v310 = vxor.u32 %v309, 2147483648
    %v311 = vlaneseq
    %v312 = vand.u32 %v311, 127
    %vm313 = vcmp.eq.s32.totalorder %v312, 20
    %v314 = vmul.f32 %v310, %v303
    %315 = vadd.xlane.f32.xlu0 %v314
    %v316 = vpop.xlane.xlu0 %315
    %v317 = vsel %vm313, %v316, %v303
    %v318 = vmul.f32 %v310, %v307
    %319 = vadd.xlane.f32.xlu0 %v318
    %v320 = vpop.xlane.xlu0 %319
    %v321 = vsel %vm313, %v320, %v307
    %s322 = scalar_lea.vmem [#allocation2], 19
    %v323 = vld [vmem:[%s322] ss:$0 sm:$0xff]
    %v324 = vxor.u32 %v323, 2147483648
    %v325 = vlaneseq
    %v326 = vand.u32 %v325, 127
    %vm327 = vcmp.eq.s32.totalorder %v326, 19
    %v328 = vmul.f32 %v324, %v317
    %329 = vadd.xlane.f32.xlu0 %v328
    %v330 = vpop.xlane.xlu0 %329
    %v331 = vsel %vm327, %v330, %v317
    %v332 = vmul.f32 %v324, %v321
    %333 = vadd.xlane.f32.xlu0 %v332
    %v334 = vpop.xlane.xlu0 %333
    %v335 = vsel %vm327, %v334, %v321
    %s336 = scalar_lea.vmem [#allocation2], 18
    %v337 = vld [vmem:[%s336] ss:$0 sm:$0xff]
    %v338 = vxor.u32 %v337, 2147483648
    %v339 = vlaneseq
    %v340 = vand.u32 %v339, 127
    %vm341 = vcmp.eq.s32.totalorder %v340, 18
    %v342 = vmul.f32 %v338, %v331
    %343 = vadd.xlane.f32.xlu0 %v342
    %v344 = vpop.xlane.xlu0 %343
    %v345 = vsel %vm341, %v344, %v331
    %v346 = vmul.f32 %v338, %v335
    %347 = vadd.xlane.f32.xlu0 %v346
    %v348 = vpop.xlane.xlu0 %347
    %v349 = vsel %vm341, %v348, %v335
    %s350 = scalar_lea.vmem [#allocation2], 17
    %v351 = vld [vmem:[%s350] ss:$0 sm:$0xff]
    %v352 = vxor.u32 %v351, 2147483648
    %v353 = vlaneseq
    %v354 = vand.u32 %v353, 127
    %vm355 = vcmp.eq.s32.totalorder %v354, 17
    %v356 = vmul.f32 %v352, %v345
    %357 = vadd.xlane.f32.xlu0 %v356
    %v358 = vpop.xlane.xlu0 %357
    %v359 = vsel %vm355, %v358, %v345
    %v360 = vmul.f32 %v352, %v349
    %361 = vadd.xlane.f32.xlu0 %v360
    %v362 = vpop.xlane.xlu0 %361
    %v363 = vsel %vm355, %v362, %v349
    %s364 = scalar_lea.vmem [#allocation2], 16
    %v365 = vld [vmem:[%s364] ss:$0 sm:$0xff]
    %v366 = vxor.u32 %v365, 2147483648
    %v367 = vlaneseq
    %v368 = vand.u32 %v367, 127
    %vm369 = vcmp.eq.s32.totalorder %v368, 16
    %v370 = vmul.f32 %v366, %v359
    %371 = vadd.xlane.f32.xlu0 %v370
    %v372 = vpop.xlane.xlu0 %371
    %v373 = vsel %vm369, %v372, %v359
    %v374 = vmul.f32 %v366, %v363
    %375 = vadd.xlane.f32.xlu0 %v374
    %v376 = vpop.xlane.xlu0 %375
    %v377 = vsel %vm369, %v376, %v363
    %s378 = scalar_lea.vmem [#allocation2], 15
    %v379 = vld [vmem:[%s378] ss:$0 sm:$0xff]
    %v380 = vxor.u32 %v379, 2147483648
    %v381 = vlaneseq
    %v382 = vand.u32 %v381, 127
    %vm383 = vcmp.eq.s32.totalorder %v382, 15
    %v384 = vmul.f32 %v380, %v177
    %385 = vadd.xlane.f32.xlu0 %v384
    %v386 = vpop.xlane.xlu0 %385
    %v387 = vsel %vm383, %v386, %v177
    %v388 = vmul.f32 %v380, %v373
    %389 = vadd.xlane.f32.xlu0 %v388
    %v390 = vpop.xlane.xlu0 %389
    %v391 = vsel %vm383, %v390, %v373
    %v392 = vmul.f32 %v380, %v377
    %393 = vadd.xlane.f32.xlu0 %v392
    %v394 = vpop.xlane.xlu0 %393
    %v395 = vsel %vm383, %v394, %v377
    %s396 = scalar_lea.vmem [#allocation2], 14
    %v397 = vld [vmem:[%s396] ss:$0 sm:$0xff]
    %v398 = vxor.u32 %v397, 2147483648
    %v399 = vlaneseq
    %v400 = vand.u32 %v399, 127
    %vm401 = vcmp.eq.s32.totalorder %v400, 14
    %v402 = vmul.f32 %v398, %v387
    %403 = vadd.xlane.f32.xlu0 %v402
    %v404 = vpop.xlane.xlu0 %403
    %v405 = vsel %vm401, %v404, %v387
    %v406 = vmul.f32 %v398, %v391
    %407 = vadd.xlane.f32.xlu0 %v406
    %v408 = vpop.xlane.xlu0 %407
    %v409 = vsel %vm401, %v408, %v391
    %v410 = vmul.f32 %v398, %v395
    %411 = vadd.xlane.f32.xlu0 %v410
    %v412 = vpop.xlane.xlu0 %411
    %v413 = vsel %vm401, %v412, %v395
    %s414 = scalar_lea.vmem [#allocation2], 13
    %v415 = vld [vmem:[%s414] ss:$0 sm:$0xff]
    %v416 = vxor.u32 %v415, 2147483648
    %v417 = vlaneseq
    %v418 = vand.u32 %v417, 127
    %vm419 = vcmp.eq.s32.totalorder %v418, 13
    %v420 = vmul.f32 %v416, %v405
    %421 = vadd.xlane.f32.xlu0 %v420
    %v422 = vpop.xlane.xlu0 %421
    %v423 = vsel %vm419, %v422, %v405
    %v424 = vmul.f32 %v416, %v409
    %425 = vadd.xlane.f32.xlu0 %v424
    %v426 = vpop.xlane.xlu0 %425
    %v427 = vsel %vm419, %v426, %v409
    %v428 = vmul.f32 %v416, %v413
    %429 = vadd.xlane.f32.xlu0 %v428
    %v430 = vpop.xlane.xlu0 %429
    %v431 = vsel %vm419, %v430, %v413
    %s432 = scalar_lea.vmem [#allocation2], 12
    %v433 = vld [vmem:[%s432] ss:$0 sm:$0xff]
    %v434 = vxor.u32 %v433, 2147483648
    %v435 = vlaneseq
    %v436 = vand.u32 %v435, 127
    %vm437 = vcmp.eq.s32.totalorder %v436, 12
    %v438 = vmul.f32 %v434, %v423
    %439 = vadd.xlane.f32.xlu0 %v438
    %v440 = vpop.xlane.xlu0 %439
    %v441 = vsel %vm437, %v440, %v423
    %v442 = vmul.f32 %v434, %v427
    %443 = vadd.xlane.f32.xlu0 %v442
    %v444 = vpop.xlane.xlu0 %443
    %v445 = vsel %vm437, %v444, %v427
    %v446 = vmul.f32 %v434, %v431
    %447 = vadd.xlane.f32.xlu0 %v446
    %v448 = vpop.xlane.xlu0 %447
    %v449 = vsel %vm437, %v448, %v431
    %s450 = scalar_lea.vmem [#allocation2], 11
    %v451 = vld [vmem:[%s450] ss:$0 sm:$0xff]
    %v452 = vxor.u32 %v451, 2147483648
    %v453 = vlaneseq
    %v454 = vand.u32 %v453, 127
    %vm455 = vcmp.eq.s32.totalorder %v454, 11
    %v456 = vmul.f32 %v452, %v441
    %457 = vadd.xlane.f32.xlu0 %v456
    %v458 = vpop.xlane.xlu0 %457
    %v459 = vsel %vm455, %v458, %v441
    %v460 = vmul.f32 %v452, %v445
    %461 = vadd.xlane.f32.xlu0 %v460
    %v462 = vpop.xlane.xlu0 %461
    %v463 = vsel %vm455, %v462, %v445
    %v464 = vmul.f32 %v452, %v449
    %465 = vadd.xlane.f32.xlu0 %v464
    %v466 = vpop.xlane.xlu0 %465
    %v467 = vsel %vm455, %v466, %v449
    %s468 = scalar_lea.vmem [#allocation2], 10
    %v469 = vld [vmem:[%s468] ss:$0 sm:$0xff]
    %v470 = vxor.u32 %v469, 2147483648
    %v471 = vlaneseq
    %v472 = vand.u32 %v471, 127
    %vm473 = vcmp.eq.s32.totalorder %v472, 10
    %v474 = vmul.f32 %v470, %v459
    %475 = vadd.xlane.f32.xlu0 %v474
    %v476 = vpop.xlane.xlu0 %475
    %v477 = vsel %vm473, %v476, %v459
    %v478 = vmul.f32 %v470, %v463
    %479 = vadd.xlane.f32.xlu0 %v478
    %v480 = vpop.xlane.xlu0 %479
    %v481 = vsel %vm473, %v480, %v463
    %v482 = vmul.f32 %v470, %v467
    %483 = vadd.xlane.f32.xlu0 %v482
    %v484 = vpop.xlane.xlu0 %483
    %v485 = vsel %vm473, %v484, %v467
    %s486 = scalar_lea.vmem [#allocation2], 9
    %v487 = vld [vmem:[%s486] ss:$0 sm:$0xff]
    %v488 = vxor.u32 %v487, 2147483648
    %v489 = vlaneseq
    %v490 = vand.u32 %v489, 127
    %vm491 = vcmp.eq.s32.totalorder %v490, 9
    %v492 = vmul.f32 %v488, %v477
    %493 = vadd.xlane.f32.xlu0 %v492
    %v494 = vpop.xlane.xlu0 %493
    %v495 = vsel %vm491, %v494, %v477
    %v496 = vmul.f32 %v488, %v481
    %497 = vadd.xlane.f32.xlu0 %v496
    %v498 = vpop.xlane.xlu0 %497
    %v499 = vsel %vm491, %v498, %v481
    %v500 = vmul.f32 %v488, %v485
    %501 = vadd.xlane.f32.xlu0 %v500
    %v502 = vpop.xlane.xlu0 %501
    %v503 = vsel %vm491, %v502, %v485
    %s504 = scalar_lea.vmem [#allocation2], 8
    %v505 = vld [vmem:[%s504] ss:$0 sm:$0xff]
    %v506 = vxor.u32 %v505, 2147483648
    %v507 = vlaneseq
    %v508 = vand.u32 %v507, 127
    %vm509 = vcmp.eq.s32.totalorder %v508, 8
    %v510 = vmul.f32 %v506, %v495
    %511 = vadd.xlane.f32.xlu0 %v510
    %v512 = vpop.xlane.xlu0 %511
    %v513 = vsel %vm509, %v512, %v495
    %v514 = vmul.f32 %v506, %v499
    %515 = vadd.xlane.f32.xlu0 %v514
    %v516 = vpop.xlane.xlu0 %515
    %v517 = vsel %vm509, %v516, %v499
    %v518 = vmul.f32 %v506, %v503
    %519 = vadd.xlane.f32.xlu0 %v518
    %v520 = vpop.xlane.xlu0 %519
    %v521 = vsel %vm509, %v520, %v503
    %s522 = scalar_lea.vmem [#allocation2], 7
    %v523 = vld [vmem:[%s522] ss:$0 sm:$0xff]
    %v524 = vxor.u32 %v523, 2147483648
    %v525 = vlaneseq
    %v526 = vand.u32 %v525, 127
    %vm527 = vcmp.eq.s32.totalorder %v526, 7
    %v528 = vmul.f32 %v524, %v170
    %529 = vadd.xlane.f32.xlu0 %v528
    %v530 = vpop.xlane.xlu0 %529
    %v531 = vsel %vm527, %v530, %v170
    %v532 = vmul.f32 %v524, %v513
    %533 = vadd.xlane.f32.xlu0 %v532
    %v534 = vpop.xlane.xlu0 %533
    %v535 = vsel %vm527, %v534, %v513
    %v536 = vmul.f32 %v524, %v517
    %537 = vadd.xlane.f32.xlu0 %v536
    %v538 = vpop.xlane.xlu0 %537
    %v539 = vsel %vm527, %v538, %v517
    %v540 = vmul.f32 %v524, %v521
    %541 = vadd.xlane.f32.xlu0 %v540
    %v542 = vpop.xlane.xlu0 %541
    %v543 = vsel %vm527, %v542, %v521
    %s544 = scalar_lea.vmem [#allocation2], 6
    %v545 = vld [vmem:[%s544] ss:$0 sm:$0xff]
    %v546 = vxor.u32 %v545, 2147483648
    %v547 = vlaneseq
    %v548 = vand.u32 %v547, 127
    %vm549 = vcmp.eq.s32.totalorder %v548, 6
    %v550 = vmul.f32 %v546, %v531
    %551 = vadd.xlane.f32.xlu0 %v550
    %v552 = vpop.xlane.xlu0 %551
    %v553 = vsel %vm549, %v552, %v531
    %v554 = vmul.f32 %v546, %v535
    %555 = vadd.xlane.f32.xlu0 %v554
    %v556 = vpop.xlane.xlu0 %555
    %v557 = vsel %vm549, %v556, %v535
    %v558 = vmul.f32 %v546, %v539
    %559 = vadd.xlane.f32.xlu0 %v558
    %v560 = vpop.xlane.xlu0 %559
    %v561 = vsel %vm549, %v560, %v539
    %v562 = vmul.f32 %v546, %v543
    %563 = vadd.xlane.f32.xlu0 %v562
    %v564 = vpop.xlane.xlu0 %563
    %v565 = vsel %vm549, %v564, %v543
    %s566 = scalar_lea.vmem [#allocation2], 5
    %v567 = vld [vmem:[%s566] ss:$0 sm:$0xff]
    %v568 = vxor.u32 %v567, 2147483648
    %v569 = vlaneseq
    %v570 = vand.u32 %v569, 127
    %vm571 = vcmp.eq.s32.totalorder %v570, 5
    %v572 = vmul.f32 %v568, %v553
    %573 = vadd.xlane.f32.xlu0 %v572
    %v574 = vpop.xlane.xlu0 %573
    %v575 = vsel %vm571, %v574, %v553
    %v576 = vmul.f32 %v568, %v557
    %577 = vadd.xlane.f32.xlu0 %v576
    %v578 = vpop.xlane.xlu0 %577
    %v579 = vsel %vm571, %v578, %v557
    %v580 = vmul.f32 %v568, %v561
    %581 = vadd.xlane.f32.xlu0 %v580
    %v582 = vpop.xlane.xlu0 %581
    %v583 = vsel %vm571, %v582, %v561
    %v584 = vmul.f32 %v568, %v565
    %585 = vadd.xlane.f32.xlu0 %v584
    %v586 = vpop.xlane.xlu0 %585
    %v587 = vsel %vm571, %v586, %v565
    %s588 = scalar_lea.vmem [#allocation2], 4
    %v589 = vld [vmem:[%s588] ss:$0 sm:$0xff]
    %v590 = vxor.u32 %v589, 2147483648
    %v591 = vlaneseq
    %v592 = vand.u32 %v591, 127
    %vm593 = vcmp.eq.s32.totalorder %v592, 4
    %v594 = vmul.f32 %v590, %v575
    %595 = vadd.xlane.f32.xlu0 %v594
    %v596 = vpop.xlane.xlu0 %595
    %v597 = vsel %vm593, %v596, %v575
    %v598 = vmul.f32 %v590, %v579
    %599 = vadd.xlane.f32.xlu0 %v598
    %v600 = vpop.xlane.xlu0 %599
    %v601 = vsel %vm593, %v600, %v579
    %v602 = vmul.f32 %v590, %v583
    %603 = vadd.xlane.f32.xlu0 %v602
    %v604 = vpop.xlane.xlu0 %603
    %v605 = vsel %vm593, %v604, %v583
    %v606 = vmul.f32 %v590, %v587
    %607 = vadd.xlane.f32.xlu0 %v606
    %v608 = vpop.xlane.xlu0 %607
    %v609 = vsel %vm593, %v608, %v587
    %s610 = scalar_lea.vmem [#allocation2], 3
    %v611 = vld [vmem:[%s610] ss:$0 sm:$0xff]
    %v612 = vxor.u32 %v611, 2147483648
    %v613 = vlaneseq
    %v614 = vand.u32 %v613, 127
    %vm615 = vcmp.eq.s32.totalorder %v614, 3
    %v616 = vmul.f32 %v612, %v597
    %617 = vadd.xlane.f32.xlu0 %v616
    %v618 = vpop.xlane.xlu0 %617
    %v619 = vsel %vm615, %v618, %v597
    %v620 = vmul.f32 %v612, %v601
    %621 = vadd.xlane.f32.xlu0 %v620
    %v622 = vpop.xlane.xlu0 %621
    %v623 = vsel %vm615, %v622, %v601
    %v624 = vmul.f32 %v612, %v605
    %625 = vadd.xlane.f32.xlu0 %v624
    %v626 = vpop.xlane.xlu0 %625
    %v627 = vsel %vm615, %v626, %v605
    %v628 = vmul.f32 %v612, %v609
    %629 = vadd.xlane.f32.xlu0 %v628
    %v630 = vpop.xlane.xlu0 %629
    %v631 = vsel %vm615, %v630, %v609
    %s632 = scalar_lea.vmem [#allocation2], 2
    %v633 = vld [vmem:[%s632] ss:$0 sm:$0xff]
    %v634 = vxor.u32 %v633, 2147483648
    %v635 = vlaneseq
    %v636 = vand.u32 %v635, 127
    %vm637 = vcmp.eq.s32.totalorder %v636, 2
    %v638 = vmul.f32 %v634, %v619
    %639 = vadd.xlane.f32.xlu0 %v638
    %v640 = vpop.xlane.xlu0 %639
    %v641 = vsel %vm637, %v640, %v619
    %v642 = vmul.f32 %v634, %v623
    %643 = vadd.xlane.f32.xlu0 %v642
    %v644 = vpop.xlane.xlu0 %643
    %v645 = vsel %vm637, %v644, %v623
    %v646 = vmul.f32 %v634, %v627
    %647 = vadd.xlane.f32.xlu0 %v646
    %v648 = vpop.xlane.xlu0 %647
    %v649 = vsel %vm637, %v648, %v627
    %v650 = vmul.f32 %v634, %v631
    %651 = vadd.xlane.f32.xlu0 %v650
    %v652 = vpop.xlane.xlu0 %651
    %v653 = vsel %vm637, %v652, %v631
    %s654 = scalar_lea.vmem [#allocation2], 1
    %v655 = vld [vmem:[%s654] ss:$0 sm:$0xff]
    %v656 = vxor.u32 %v655, 2147483648
    %v657 = vlaneseq
    %v658 = vand.u32 %v657, 127
    %vm659 = vcmp.eq.s32.totalorder %v658, 1
    %v660 = vmul.f32 %v656, %v641
    %661 = vadd.xlane.f32.xlu0 %v660
    %v662 = vpop.xlane.xlu0 %661
    %v663 = vsel %vm659, %v662, %v641
    %v664 = vmul.f32 %v656, %v645
    %665 = vadd.xlane.f32.xlu0 %v664
    %v666 = vpop.xlane.xlu0 %665
    %v667 = vsel %vm659, %v666, %v645
    %v668 = vmul.f32 %v656, %v649
    %669 = vadd.xlane.f32.xlu0 %v668
    %v670 = vpop.xlane.xlu0 %669
    %v671 = vsel %vm659, %v670, %v649
    %v672 = vmul.f32 %v656, %v653
    %673 = vadd.xlane.f32.xlu0 %v672
    %v674 = vpop.xlane.xlu0 %673
    %v675 = vsel %vm659, %v674, %v653
    %v676 = vld [vmem:[#allocation2] ss:$0 sm:$0xff]
    %v677 = vxor.u32 %v676, 2147483648
    %v678 = vlaneseq
    %v679 = vand.u32 %v678, 127
    %vm680 = vcmp.eq.s32.totalorder %v679, 0
    %v681 = vmul.f32 %v677, %v663
    %682 = vadd.xlane.f32.xlu0 %v681
    %v683 = vpop.xlane.xlu0 %682
    %v684 = vsel %vm680, %v683, %v663
    %v685 = vmul.f32 %v677, %v667
    %686 = vadd.xlane.f32.xlu0 %v685
    %v687 = vpop.xlane.xlu0 %686
    %v688 = vsel %vm680, %v687, %v667
    %v689 = vmul.f32 %v677, %v671
    %690 = vadd.xlane.f32.xlu0 %v689
    %v691 = vpop.xlane.xlu0 %690
    %v692 = vsel %vm680, %v691, %v671
    %v693 = vmul.f32 %v677, %v675
    %694 = vadd.xlane.f32.xlu0 %v693
    %v695 = vpop.xlane.xlu0 %694
    %v696 = vsel %vm680, %v695, %v675
    %v697 = vrcp.pop %v57
    %v698 = vmul.f32 %v57, %v697
    %v699 = vsub.f32 1.0, %v698
    %v700 = vmul.f32 %v697, %v699
    %v701 = vadd.f32 %v697, %v700
    %vm702 = vweird.f32 %v57
    %vm703 = vweird.f32 %v697
    %vm704 = vmor %vm702, %vm703
    %v705 = vsel %vm704, %v697, %v701
    %v706 = vand.u32 2147483647, %v57
    %vm707 = vcmp.eq.f32.partialorder %v706, 8.507059e+37
    %v708 = vand.u32 %v57, 2147483648
    %v709 = vor.u32 1.1754944e-38, %v708
    %v710 = vsel %vm707, %v709, %v705
    %v711 = vmul.f32 %v684, %v710
    %vm712 = vweird.f32 %v57
    %v713 = vsel %vm712, %v684, %v711
    %714 = vst [vmem:[#allocation1] sm:$0xff] %v713
    %v715 = vrcp.pop %v86
    %v716 = vmul.f32 %v86, %v715
    %v717 = vsub.f32 1.0, %v716
    %v718 = vmul.f32 %v715, %v717
    %v719 = vadd.f32 %v715, %v718
    %vm720 = vweird.f32 %v86
    %vm721 = vweird.f32 %v715
    %vm722 = vmor %vm720, %vm721
    %v723 = vsel %vm722, %v715, %v719
    %v724 = vand.u32 2147483647, %v86
    %vm725 = vcmp.eq.f32.partialorder %v724, 8.507059e+37
    %v726 = vand.u32 %v86, 2147483648
    %v727 = vor.u32 1.1754944e-38, %v726
    %v728 = vsel %vm725, %v727, %v723
    %v729 = vmul.f32 %v688, %v728
    %vm730 = vweird.f32 %v86
    %v731 = vsel %vm730, %v688, %v729
    %s732 = scalar_lea.vmem [#allocation1], 8
    %733 = vst [vmem:[%s732] sm:$0xff] %v731
    %v734 = vrcp.pop %v115
    %v735 = vmul.f32 %v115, %v734
    %v736 = vsub.f32 1.0, %v735
    %v737 = vmul.f32 %v734, %v736
    %v738 = vadd.f32 %v734, %v737
    %vm739 = vweird.f32 %v115
    %vm740 = vweird.f32 %v734
    %vm741 = vmor %vm739, %vm740
    %v742 = vsel %vm741, %v734, %v738
    %v743 = vand.u32 2147483647, %v115
    %vm744 = vcmp.eq.f32.partialorder %v743, 8.507059e+37
    %v745 = vand.u32 %v115, 2147483648
    %v746 = vor.u32 1.1754944e-38, %v745
    %v747 = vsel %vm744, %v746, %v742
    %v748 = vmul.f32 %v692, %v747
    %vm749 = vweird.f32 %v115
    %v750 = vsel %vm749, %v692, %v748
    %s751 = scalar_lea.vmem [#allocation1], 16
    %752 = vst [vmem:[%s751] sm:$0xff] %v750
    %v753 = vrcp.pop %v144
    %v754 = vmul.f32 %v144, %v753
    %v755 = vsub.f32 1.0, %v754
    %v756 = vmul.f32 %v753, %v755
    %v757 = vadd.f32 %v753, %v756
    %vm758 = vweird.f32 %v144
    %vm759 = vweird.f32 %v753
    %vm760 = vmor %vm758, %vm759
    %v761 = vsel %vm760, %v753, %v757
    %v762 = vand.u32 2147483647, %v144
    %vm763 = vcmp.eq.f32.partialorder %v762, 8.507059e+37
    %v764 = vand.u32 %v144, 2147483648
    %v765 = vor.u32 1.1754944e-38, %v764
    %v766 = vsel %vm763, %v765, %v761
    %v767 = vmul.f32 %v696, %v766
    %vm768 = vweird.f32 %v144
    %v769 = vsel %vm768, %v696, %v767
    %s770 = scalar_lea.vmem [#allocation1], 24
    %771 = vst [vmem:[%s770] sm:$0xff] %v769
    // Predicated region
    $region36: #{custom-call.9} parent=1 // pred_check
      _
    $region37: #{custom-call.9} parent=1 // pred_check_branch
      %773 = sbr.rel (0) target = $region39
    $region38: #{custom-call.9} parent=1 // pred_region
      // Predicated region
      $region40: #{custom-call.9} parent=38 // pred_check
        _
      $region41: #{custom-call.9} parent=38 // pred_check_branch
        %775 = sbr.rel (0) target = $region43
      $region42: #{custom-call.9} parent=38 // pred_region
        // Predicated region
        $region55: #{custom-call.9} parent=42 // pred_check
          _
        $region56: #{custom-call.9} parent=42 // pred_check_branch
          %797 = sbr.rel (0) target = $region58
        $region57: #{custom-call.9} parent=42 // pred_region
          loop: start=0, step=1, limit=1
          $region59: #{custom-call.9} parent=57 // loop_pre_header
            _
          $region60: #{custom-call.9} parent=57 // loop_header
            %s799 = sphi 0, %s803
            %p800 = scmp.ge.s32.totalorder %s799, 1
            %s804 = sphi [#allocation1], [#allocation1]
            %s805 = sphi %s1, %s1
          $region61: #{custom-call.9} parent=57 // loop_header_branch
            %802 = sbr.rel (%p800) target = $region65
          $region62: #{custom-call.9} parent=57 // loop_body
            %v806 = vld [vmem:[%s804] sm:$0xff]
            %807 = vst [vmem:[%s805] sm:$0xff] %v806
            %v808 = vld [vmem:[%s804 + $0x8] sm:$0xff]
            %809 = vst [vmem:[%s805 + $0x8] sm:$0xff] %v808
            %v810 = vld [vmem:[%s804 + $0x10] sm:$0xff]
            %811 = vst [vmem:[%s805 + $0x10] sm:$0xff] %v810
            %v812 = vld [vmem:[%s804 + $0x18] sm:$0xff]
            %813 = vst [vmem:[%s805 + $0x18] sm:$0xff] %v812
          $region63: #{custom-call.9} parent=57 // loop_footer
            %s803 = sadd.s32 1, %s799
          $region64: #{custom-call.9} parent=57 // loop_footer_branch
            %798 = sbr.rel target = $region60
          $region65: #{custom-call.9} parent=57 // loop_exit
            _
        $region58: #{custom-call.9} parent=42 // pred_fallthru
          _
        // Predicated region
        $region66: #{custom-call.9} parent=42 // pred_check
          _
        $region67: #{custom-call.9} parent=42 // pred_check_branch
          %815 = sbr.rel target = $region69
        $region68: #{custom-call.9} parent=42 // pred_region
          _
        $region69: #{custom-call.9} parent=42 // pred_fallthru
          _
      $region43: #{custom-call.9} parent=38 // pred_fallthru
        _
      // Predicated region
      $region44: #{custom-call.9} parent=38 // pred_check
        _
      $region45: #{custom-call.9} parent=38 // pred_check_branch
        %777 = sbr.rel target = $region47
      $region46: #{custom-call.9} parent=38 // pred_region
        %s779 = ssub.s32 256, 1
        loop: start=0, step=1, limit=1
        $region48: #{custom-call.9} parent=46 // loop_pre_header
          _
        $region49: #{custom-call.9} parent=46 // loop_header
          %s781 = sphi 0, %s785
          %p782 = scmp.ge.s32.totalorder %s781, 1
          %s786 = sphi [#allocation1], [#allocation1]
          %s787 = sphi %s1, %s1
        $region50: #{custom-call.9} parent=46 // loop_header_branch
          %784 = sbr.rel (%p782) target = $region54
        $region51: #{custom-call.9} parent=46 // loop_body
          %v788 = vld [vmem:[%s786] sm:%s779]
          %789 = vst [vmem:[%s787] sm:%s779] %v788
          %v790 = vld [vmem:[%s786 + $0x8] sm:%s779]
          %791 = vst [vmem:[%s787 + $0x8] sm:%s779] %v790
          %v792 = vld [vmem:[%s786 + $0x10] sm:%s779]
          %793 = vst [vmem:[%s787 + $0x10] sm:%s779] %v792
          %v794 = vld [vmem:[%s786 + $0x18] sm:%s779]
          %795 = vst [vmem:[%s787 + $0x18] sm:%s779] %v794
        $region52: #{custom-call.9} parent=46 // loop_footer
          %s785 = sadd.s32 1, %s781
        $region53: #{custom-call.9} parent=46 // loop_footer_branch
          %780 = sbr.rel target = $region49
        $region54: #{custom-call.9} parent=46 // loop_exit
          _
      $region47: #{custom-call.9} parent=38 // pred_fallthru
        _
    $region39: #{custom-call.9} parent=1 // pred_fallthru
      _
    %816 = vnop

// kernel: param_implicit_forward.2
$region0: #{param_implicit_forward.2}
  #allocation0 [shape = 'u32[]', space=smem, size = 0x4, offset = 0x4, fixed_abs, tag = 'smem constant byte address 0x4 - core index']
  #allocation1 [shape = 'u32[72,128]{1,0:T(1,128)}', space=vmem, size = 0x9000, scoped, tag = 'internal scratch']
  %s0 = inlined_call_operand.hbm [shape: f32[64,64], index: 0, kind: input, shape index: {}]
  %s1 = inlined_call_operand.hbm [shape: f32[32,32], index: 1, kind: input, shape index: {}]
  %s2 = inlined_call_operand.vmem [shape: f32[32,32], index: 2, kind: output, shape index: {0}]
  %s3 = inlined_call_operand.vmem [shape: f32[32,32], index: 3, kind: output, shape index: {1}]
  %4 = xla_tuple %s2, %s3
  %s5 = sld [smem:[#allocation0]]
  $region34: #{param_implicit_forward.2} parent=0
    _
  %s7 = ssub.s32 1, %s5
  %s8 = scalar_select 0, %s7, %s5
  $region1: #{param_implicit_forward.2} parent=0
    #allocation2 [shape = 'u8[32768]{0}', space=vmem, size = 0x8000, scoped, tag = 'input window, operand 0, single buffered']
    #allocation3 [shape = 's32[1]{0}', space=sflag, size = 0x4, scoped, tag = 'scoped memory for param_implicit_forward.2']
    #allocation4 [shape = 'u8[16384]{0}', space=vmem, size = 0x4000, scoped, tag = 'input window, operand 1, single buffered']
    #allocation5 [shape = 's32[1]{0}', space=sflag, size = 0x4, scoped, tag = 'scoped memory for param_implicit_forward.2']
    %9 = vsyncpa [#allocation3], 0
    %10 = vsyncpa [#allocation5], 0
    // Predicated region
    $region2: #{param_implicit_forward.2} parent=1 // pred_check
      _
    $region3: #{param_implicit_forward.2} parent=1 // pred_check_branch
      %12 = sbr.rel (0) target = $region5
    $region4: #{param_implicit_forward.2} parent=1 // pred_region
      %14 = vsyncadd [#allocation3], 0
      %s15 = sshll.u32 %s0, 4
      %s16 = int_to_ptr.hbm [resolvable:$true] %s15
      %s17 = sshll.u32 [#allocation2], 4
      %s18 = int_to_ptr.vmem [resolvable:$true] %s17
      %23 = dma.hbm_to_vmem [thread:$0]  %s16, 1024, %s18, [#allocation3], 128, 128, 8
    $region5: #{param_implicit_forward.2} parent=1 // pred_fallthru
      _
    // Predicated region
    $region6: #{param_implicit_forward.2} parent=1 // pred_check
      _
    $region7: #{param_implicit_forward.2} parent=1 // pred_check_branch
      %25 = sbr.rel (0) target = $region9
    $region8: #{param_implicit_forward.2} parent=1 // pred_region
      %27 = vsyncadd [#allocation5], 0
      %s28 = sshll.u32 %s1, 4
      %s29 = int_to_ptr.hbm [resolvable:$true] %s28
      %s30 = sshll.u32 [#allocation4], 4
      %s31 = int_to_ptr.vmem [resolvable:$true] %s30
      %36 = dma.hbm_to_vmem [thread:$0]  %s29, 512, %s31, [#allocation5], 128, 128, 8
    $region9: #{param_implicit_forward.2} parent=1 // pred_fallthru
      _
    // Predicated region
    $region10: #{param_implicit_forward.2} parent=1 // pred_check
      _
    $region11: #{param_implicit_forward.2} parent=1 // pred_check_branch
      %38 = sbr.rel (0) target = $region13
    $region12: #{param_implicit_forward.2} parent=1 // pred_region
      %40 = dma.done [#allocation3], 1024
    $region13: #{param_implicit_forward.2} parent=1 // pred_fallthru
      _
    // Predicated region
    $region14: #{param_implicit_forward.2} parent=1 // pred_check
      _
    $region15: #{param_implicit_forward.2} parent=1 // pred_check_branch
      %42 = sbr.rel (0) target = $region17
    $region16: #{param_implicit_forward.2} parent=1 // pred_region
      %44 = dma.done [#allocation5], 512
    $region17: #{param_implicit_forward.2} parent=1 // pred_fallthru
      _
    %v45 = vld [vmem:[#allocation2] sm:$0xff]
    %v46 = vld [vmem:[#allocation2 + $0x8] sm:$0xff]
    %v47 = vld [vmem:[#allocation2 + $0x10] sm:$0xff]
    %v48 = vld [vmem:[#allocation2 + $0x18] sm:$0xff]
    %v49 = vld [vmem:[#allocation2 + $0x20] sm:$0xff]
    %v50 = vld [vmem:[#allocation2 + $0x28] sm:$0xff]
    %v51 = vld [vmem:[#allocation2 + $0x30] sm:$0xff]
    %v52 = vld [vmem:[#allocation2 + $0x38] sm:$0xff]
    %v53 = vld [vmem:[#allocation4] sm:$0xff]
    %v54 = vld [vmem:[#allocation4 + $0x8] sm:$0xff]
    %v55 = vld [vmem:[#allocation4 + $0x10] sm:$0xff]
    %v56 = vld [vmem:[#allocation4 + $0x18] sm:$0xff]
    %vm57 = vcmask 523264
    %v59 = vsel %vm57, %v49, 0
    %v62 = vsel %vm57, %v50, 0
    %v65 = vsel %vm57, %v51, 0
    %v68 = vsel %vm57, %v52, 0
    %70 = vmatpush.xpose.msra.mxu0 0.0
    %71 = vmatpush.xpose.msra.mxu0 0.0
    %72 = vmatpush.xpose.msra.mxu0 0.0
    %73 = vmatpush.xpose.msra.mxu0 0.0
    %74 = vmatpush.xpose.msra.mxu0 0.0
    %75 = vmatpush.xpose.msra.mxu0 0.0
    %76 = vmatpush.xpose.msra.mxu0 0.0
    %77 = vmatpush.xpose.msra.mxu0 0.0
    %78 = vmatpush.xpose.msra.mxu0 0.0
    %79 = vmatpush.xpose.msra.mxu0 0.0
    %80 = vmatpush.xpose.msra.mxu0 0.0
    %81 = vmatpush.xpose.msra.mxu0 0.0
    %82 = vmatpush.xpose.msra.mxu0 %v68
    %83 = vmatpush.xpose.msra.mxu0 %v65
    %84 = vmatpush.xpose.msra.mxu0 %v62
    %85 = vmatpush.xpose.msra.mxu0 %v59
    %86 = vmatmul.f32.gmra.mxu0 %v59
    %v87 = vpop.f32.mrf.mxu0
    %v88 = vadd.f32 0.0, %v87
    %89 = vmatmul.f32.gmra.mxu0 %v62
    %v90 = vpop.f32.mrf.mxu0
    %v91 = vadd.f32 0.0, %v90
    %92 = vmatmul.f32.gmra.mxu0 %v65
    %v93 = vpop.f32.mrf.mxu0
    %v94 = vadd.f32 0.0, %v93
    %95 = vmatmul.f32.gmra.mxu0 %v68
    %v96 = vpop.f32.mrf.mxu0
    %v97 = vadd.f32 0.0, %v96
    %98 = vdwg.mxu0
    %v100 = vsel %vm57, %v45, 0
    %v103 = vsel %vm57, %v46, 0
    %v106 = vsel %vm57, %v47, 0
    %v109 = vsel %vm57, %v48, 0
    %111 = vmatpush.xpose.msra.mxu0 0.0
    %112 = vmatpush.xpose.msra.mxu0 0.0
    %113 = vmatpush.xpose.msra.mxu0 0.0
    %114 = vmatpush.xpose.msra.mxu0 0.0
    %115 = vmatpush.xpose.msra.mxu0 0.0
    %116 = vmatpush.xpose.msra.mxu0 0.0
    %117 = vmatpush.xpose.msra.mxu0 0.0
    %118 = vmatpush.xpose.msra.mxu0 0.0
    %119 = vmatpush.xpose.msra.mxu0 0.0
    %120 = vmatpush.xpose.msra.mxu0 0.0
    %121 = vmatpush.xpose.msra.mxu0 0.0
    %122 = vmatpush.xpose.msra.mxu0 0.0
    %123 = vmatpush.xpose.msra.mxu0 %v109
    %124 = vmatpush.xpose.msra.mxu0 %v106
    %125 = vmatpush.xpose.msra.mxu0 %v103
    %126 = vmatpush.xpose.msra.mxu0 %v100
    %127 = vmatmul.f32.gmra.mxu0 %v59
    %v128 = vpop.f32.mrf.mxu0
    %v129 = vadd.f32 0.0, %v128
    %130 = vmatmul.f32.gmra.mxu0 %v62
    %v131 = vpop.f32.mrf.mxu0
    %v132 = vadd.f32 0.0, %v131
    %133 = vmatmul.f32.gmra.mxu0 %v65
    %v134 = vpop.f32.mrf.mxu0
    %v135 = vadd.f32 0.0, %v134
    %136 = vmatmul.f32.gmra.mxu0 %v68
    %v137 = vpop.f32.mrf.mxu0
    %v138 = vadd.f32 0.0, %v137
    %139 = vdwg.mxu0
    %vm140 = vcmask 261120
    %141 = vst.msk [vmem:[%s3] sm:$0xff] %vm140, %v129
    %142 = vst.msk [vmem:[%s3 + $0x8] sm:$0xff] %vm140, %v132
    %143 = vst.msk [vmem:[%s3 + $0x10] sm:$0xff] %vm140, %v135
    %144 = vst.msk [vmem:[%s3 + $0x18] sm:$0xff] %vm140, %v138
    %145 = vmatpush.xpose.msra.mxu0 0.0
    %146 = vmatpush.xpose.msra.mxu0 0.0
    %147 = vmatpush.xpose.msra.mxu0 0.0
    %148 = vmatpush.xpose.msra.mxu0 0.0
    %149 = vmatpush.xpose.msra.mxu0 0.0
    %150 = vmatpush.xpose.msra.mxu0 0.0
    %151 = vmatpush.xpose.msra.mxu0 0.0
    %152 = vmatpush.xpose.msra.mxu0 0.0
    %153 = vmatpush.xpose.msra.mxu0 0.0
    %154 = vmatpush.xpose.msra.mxu0 0.0
    %155 = vmatpush.xpose.msra.mxu0 0.0
    %156 = vmatpush.xpose.msra.mxu0 0.0
    %157 = vmatpush.xpose.msra.mxu0 %v109
    %158 = vmatpush.xpose.msra.mxu0 %v106
    %159 = vmatpush.xpose.msra.mxu0 %v103
    %160 = vmatpush.xpose.msra.mxu0 %v100
    %161 = vmatmul.f32.gmra.mxu0 %v100
    %v162 = vpop.f32.mrf.mxu0
    %v163 = vadd.f32 %v88, %v162
    %164 = vmatmul.f32.gmra.mxu0 %v103
    %v165 = vpop.f32.mrf.mxu0
    %v166 = vadd.f32 %v91, %v165
    %167 = vmatmul.f32.gmra.mxu0 %v106
    %v168 = vpop.f32.mrf.mxu0
    %v169 = vadd.f32 %v94, %v168
    %170 = vmatmul.f32.gmra.mxu0 %v109
    %v171 = vpop.f32.mrf.mxu0
    %v172 = vadd.f32 %v97, %v171
    %173 = vdwg.mxu0
    %v174 = vadd.f32 %v163, %v53
    %v175 = vadd.f32 %v166, %v54
    %v176 = vadd.f32 %v169, %v55
    %v177 = vadd.f32 %v172, %v56
    %178 = vxpose.xlu0.b32.start [1/16] %v53, 128
    %179 = vxpose.xlu0.b32.cont [2/16] %v54, 128
    %180 = vxpose.xlu0.b32.cont [3/16] %v55, 128
    %181 = vxpose.xlu0.b32.cont [4/16] %v56, 128
    %182 = vxpose.xlu0.b32.cont [5/16] 0.0, 128
    %183 = vxpose.xlu0.b32.cont [6/16] 0.0, 128
    %184 = vxpose.xlu0.b32.cont [7/16] 0.0, 128
    %185 = vxpose.xlu0.b32.cont [8/16] 0.0, 128
    %186 = vxpose.xlu0.b32.cont [9/16] 0.0, 128
    %187 = vxpose.xlu0.b32.cont [10/16] 0.0, 128
    %188 = vxpose.xlu0.b32.cont [11/16] 0.0, 128
    %189 = vxpose.xlu0.b32.cont [12/16] 0.0, 128
    %190 = vxpose.xlu0.b32.cont [13/16] 0.0, 128
    %191 = vxpose.xlu0.b32.cont [14/16] 0.0, 128
    %192 = vxpose.xlu0.b32.cont [15/16] 0.0, 128
    %193 = vxpose.xlu0.b32.end [16/16] 0.0, 128
    %v194 = vpop.trf.xlu0
    %v195 = vpop.trf.xlu0
    %v196 = vpop.trf.xlu0
    %v197 = vpop.trf.xlu0
    %v198 = vpop.trf.xlu0
    %v199 = vpop.trf.xlu0
    %v200 = vpop.trf.xlu0
    %v201 = vpop.trf.xlu0
    %v202 = vpop.trf.xlu0
    %v203 = vpop.trf.xlu0
    %v204 = vpop.trf.xlu0
    %v205 = vpop.trf.xlu0
    %v206 = vpop.trf.xlu0
    %v207 = vpop.trf.xlu0
    %v208 = vpop.trf.xlu0
    %v209 = vpop.trf.xlu0
    %v210 = vsub.f32 %v174, %v194
    %v211 = vsub.f32 %v175, %v195
    %v212 = vsub.f32 %v176, %v196
    %v213 = vsub.f32 %v177, %v197
    %v214 = vmul.f32 %v210, 0.5
    %v215 = vmul.f32 %v211, 0.5
    %v216 = vmul.f32 %v212, 0.5
    %v217 = vmul.f32 %v213, 0.5
    %v218 = vlaneseq
    %v219 = vshrl.u32 %v218, 7
    %v220 = vadd.s32 %v219, 8
    %v221 = vadd.s32 %v219, 16
    %v222 = vadd.s32 %v219, 24
    %v223 = vlaneseq
    %v224 = vand.u32 %v223, 127
    %vm225 = vcmp.eq.s32.totalorder %v219, %v224
    %vm226 = vcmp.eq.s32.totalorder %v220, %v224
    %vm227 = vcmp.eq.s32.totalorder %v221, %v224
    %vm228 = vcmp.eq.s32.totalorder %v222, %v224
    %v229 = vsel %vm225, 0.0001, 0.0
    %v230 = vsel %vm226, 0.0001, 0.0
    %v231 = vsel %vm227, 0.0001, 0.0
    %v232 = vsel %vm228, 0.0001, 0.0
    %v233 = vadd.f32 %v214, %v229
    %v234 = vadd.f32 %v215, %v230
    %v235 = vadd.f32 %v216, %v231
    %v236 = vadd.f32 %v217, %v232
    %237 = vst.msk [vmem:[%s2] sm:$0xff] %vm140, %v233
    %238 = vst.msk [vmem:[%s2 + $0x8] sm:$0xff] %vm140, %v234
    %239 = vst.msk [vmem:[%s2 + $0x10] sm:$0xff] %vm140, %v235
    %240 = vst.msk [vmem:[%s2 + $0x18] sm:$0xff] %vm140, %v236
    // Predicated region
    $region18: #{param_implicit_forward.2} parent=1 // pred_check
      _
    $region19: #{param_implicit_forward.2} parent=1 // pred_check_branch
      %242 = sbr.rel (0) target = $region21
    $region20: #{param_implicit_forward.2} parent=1 // pred_region
      _
    $region21: #{param_implicit_forward.2} parent=1 // pred_fallthru
      _
    // Predicated region
    $region22: #{param_implicit_forward.2} parent=1 // pred_check
      _
    $region23: #{param_implicit_forward.2} parent=1 // pred_check_branch
      %244 = sbr.rel (0) target = $region25
    $region24: #{param_implicit_forward.2} parent=1 // pred_region
      _
    $region25: #{param_implicit_forward.2} parent=1 // pred_fallthru
      _
    // Predicated region
    $region26: #{param_implicit_forward.2} parent=1 // pred_check
      _
    $region27: #{param_implicit_forward.2} parent=1 // pred_check_branch
      %246 = sbr.rel (0) target = $region29
    $region28: #{param_implicit_forward.2} parent=1 // pred_region
      _
    $region29: #{param_implicit_forward.2} parent=1 // pred_fallthru
      _
    // Predicated region
    $region30: #{param_implicit_forward.2} parent=1 // pred_check
      _
    $region31: #{param_implicit_forward.2} parent=1 // pred_check_branch
      %248 = sbr.rel (0) target = $region33
    $region32: #{param_implicit_forward.2} parent=1 // pred_region
      _
    $region33: #{param_implicit_forward.2} parent=1 // pred_fallthru
      _
    %249 = vsyncpa [#allocation3], 1
    %250 = vsyncpa [#allocation5], 1

// kernel: param_implicit_forward.3
$region0: #{param_implicit_forward.3}
  #allocation0 [shape = 'u32[]', space=smem, size = 0x4, offset = 0x4, fixed_abs, tag = 'smem constant byte address 0x4 - core index']
  #allocation1 [shape = 'u32[72,128]{1,0:T(1,128)}', space=vmem, size = 0x9000, scoped, tag = 'internal scratch']
  %s0 = inlined_call_operand.vmem [shape: f32[8,40], index: 0, kind: input, shape index: {}]
  %s1 = inlined_call_operand.vmem [shape: f32[128,40], index: 1, kind: input, shape index: {}]
  %s2 = inlined_call_operand.vmem [shape: f32[8,128], index: 2, kind: output, shape index: {}]
  %s3 = sld [smem:[#allocation0]]
  $region18: #{param_implicit_forward.3} parent=0
    _
  %s5 = ssub.s32 1, %s3
  %s6 = scalar_select 0, %s5, %s3
  // Predicated region
  $region2: #{param_implicit_forward.3} parent=0 // pred_check
    _
  $region3: #{param_implicit_forward.3} parent=0 // pred_check_branch
    %8 = sbr.rel (0) target = $region5
  $region4: #{param_implicit_forward.3} parent=0 // pred_region
    _
  $region5: #{param_implicit_forward.3} parent=0 // pred_fallthru
    _
  // Predicated region
  $region6: #{param_implicit_forward.3} parent=0 // pred_check
    _
  $region7: #{param_implicit_forward.3} parent=0 // pred_check_branch
    %10 = sbr.rel (0) target = $region9
  $region8: #{param_implicit_forward.3} parent=0 // pred_region
    _
  $region9: #{param_implicit_forward.3} parent=0 // pred_fallthru
    _
  %v11 = vld [vmem:[%s0] sm:$0xff]
  %v12 = vld [vmem:[%s1] sm:$0xff]
  %v13 = vld [vmem:[%s1 + $0x8] sm:$0xff]
  %v14 = vld [vmem:[%s1 + $0x10] sm:$0xff]
  %v15 = vld [vmem:[%s1 + $0x18] sm:$0xff]
  %v16 = vld [vmem:[%s1 + $0x20] sm:$0xff]
  %v17 = vld [vmem:[%s1 + $0x28] sm:$0xff]
  %v18 = vld [vmem:[%s1 + $0x30] sm:$0xff]
  %v19 = vld [vmem:[%s1 + $0x38] sm:$0xff]
  %v20 = vld [vmem:[%s1 + $0x40] sm:$0xff]
  %v21 = vld [vmem:[%s1 + $0x48] sm:$0xff]
  %v22 = vld [vmem:[%s1 + $0x50] sm:$0xff]
  %v23 = vld [vmem:[%s1 + $0x58] sm:$0xff]
  %v24 = vld [vmem:[%s1 + $0x60] sm:$0xff]
  %v25 = vld [vmem:[%s1 + $0x68] sm:$0xff]
  %v26 = vld [vmem:[%s1 + $0x70] sm:$0xff]
  %v27 = vld [vmem:[%s1 + $0x78] sm:$0xff]
  %vm28 = vcmask 326656
  %v30 = vsel %vm28, %v11, 0
  %v33 = vsel %vm28, %v12, 0
  %v36 = vsel %vm28, %v13, 0
  %v39 = vsel %vm28, %v14, 0
  %v42 = vsel %vm28, %v15, 0
  %v45 = vsel %vm28, %v16, 0
  %v48 = vsel %vm28, %v17, 0
  %v51 = vsel %vm28, %v18, 0
  %v54 = vsel %vm28, %v19, 0
  %v57 = vsel %vm28, %v20, 0
  %v60 = vsel %vm28, %v21, 0
  %v63 = vsel %vm28, %v22, 0
  %v66 = vsel %vm28, %v23, 0
  %v69 = vsel %vm28, %v24, 0
  %v72 = vsel %vm28, %v25, 0
  %v75 = vsel %vm28, %v26, 0
  %v78 = vsel %vm28, %v27, 0
  %80 = vmatpush.xpose.msra.mxu0 %v78
  %81 = vmatpush.xpose.msra.mxu0 %v75
  %82 = vmatpush.xpose.msra.mxu0 %v72
  %83 = vmatpush.xpose.msra.mxu0 %v69
  %84 = vmatpush.xpose.msra.mxu0 %v66
  %85 = vmatpush.xpose.msra.mxu0 %v63
  %86 = vmatpush.xpose.msra.mxu0 %v60
  %87 = vmatpush.xpose.msra.mxu0 %v57
  %88 = vmatpush.xpose.msra.mxu0 %v54
  %89 = vmatpush.xpose.msra.mxu0 %v51
  %90 = vmatpush.xpose.msra.mxu0 %v48
  %91 = vmatpush.xpose.msra.mxu0 %v45
  %92 = vmatpush.xpose.msra.mxu0 %v42
  %93 = vmatpush.xpose.msra.mxu0 %v39
  %94 = vmatpush.xpose.msra.mxu0 %v36
  %95 = vmatpush.xpose.msra.mxu0 %v33
  %96 = vmatmul.f32.gmra.mxu0 %v30
  %v97 = vpop.f32.mrf.mxu0
  %v98 = vadd.f32 0.0, %v97
  %99 = vdwg.mxu0
  %100 = vst [vmem:[%s2] sm:$0xff] %v98
  // Predicated region
  $region10: #{param_implicit_forward.3} parent=0 // pred_check
    _
  $region11: #{param_implicit_forward.3} parent=0 // pred_check_branch
    %102 = sbr.rel (0) target = $region13
  $region12: #{param_implicit_forward.3} parent=0 // pred_region
    _
  $region13: #{param_implicit_forward.3} parent=0 // pred_fallthru
    _
  // Predicated region
  $region14: #{param_implicit_forward.3} parent=0 // pred_check
    _
  $region15: #{param_implicit_forward.3} parent=0 // pred_check_branch
    %104 = sbr.rel (0) target = $region17
  $region16: #{param_implicit_forward.3} parent=0 // pred_region
    _
  $region17: #{param_implicit_forward.3} parent=0 // pred_fallthru
    _

</llo_original>
